<compile_context>
chip_gen: v7x
topology: tpu7x:2x2x1
jax: 0.10.0
libtpu: 0.0.40
codegen_flags: <defaults>
</compile_context>

<pallas_src>
import math

import jax
import jax.numpy as jnp
from jax.experimental import pallas as pl
from jax.experimental.pallas import tpu as pltpu


HALO = 16          # halo rows per tile side: >= num conv layers (3) and a
                   # multiple of the bf16 sublane tile (16) for aligned blocks
T_ALIGN = 16       # T tile sizes are multiples of this (bf16 sublane packing)
COUT = 2           # true number of output classes
COUT_PAD = 128     # lane-dense padded output width


def _round_up(x, m):
    return ((x + m - 1) // m) * m


# -----------------------------------------------------------------------------
# Pallas kernel
# -----------------------------------------------------------------------------
def _cls_head_kernel(lens_ref,                        # scalar prefetch: (B,) int32
                     x_ref, lh_ref, rh_ref,           # bf16 activations
                     w1_ref, b1_ref, w2_ref, b2_ref, wc_ref, bc_ref,
                     out_ref):
    B, tt, cin = x_ref.shape
    h_rows = lh_ref.shape[2]
    t_ext = tt + 2 * h_rows
    n = B * t_ext
    cout = out_ref.shape[-1]

    # Assemble the halo-extended tile along T, flatten (B, T_ext, C) ->
    # (B*T_ext, C) (free: leading dims merge).  Upcast once; elementwise math
    # stays f32, only the MXU operands are cast to bf16 below.
    x = jnp.concatenate([lh_ref[0], x_ref[...], rh_ref[0]], axis=1)
    x = x.reshape(n, cin).astype(jnp.float32)

    # Rebuild the valid-length mask in-kernel from the scalar-prefetched
    # lengths (no lane-sparse (.,.,1) mask DMA).  pos = global time index of
    # each extended-tile row.
    t0 = pl.program_id(0) * tt - h_rows
    pos = jax.lax.broadcasted_iota(jnp.int32, (B, t_ext, 1), 1) + t0
    b_iota = jax.lax.broadcasted_iota(jnp.int32, (B, t_ext, 1), 0)
    valid = jnp.zeros((B, t_ext, 1), jnp.int32)
    for b in range(B):
        valid = jnp.where(b_iota == b, lens_ref[b], valid)
    m = jnp.logical_and(pos >= 0, pos < valid).astype(jnp.float32)
    m = m.reshape(n, 1)

    def conv3(h, w_ref, b_ref):
        # k=3 "same" conv as one fused matmul.  pltpu.roll wraps at the
        # tile/batch boundaries of the flattened layout; the wrapped rows only
        # pollute rows within 3 of a boundary, all of which lie inside the
        # HALO rows discarded before the store, so no explicit edge zeroing is
        # needed.
        hp = pltpu.roll(h, 1, axis=0)                 # h[t-1]
        hn = pltpu.roll(h, n - 1, axis=0)             # h[t+1]  (shift -1 mod n)
        lhs = jnp.concatenate([hp, h, hn], axis=-1).astype(jnp.bfloat16)
        y = jnp.dot(lhs, w_ref[...], preferred_element_type=jnp.float32)
        return y + b_ref[...]

    # module order per layer: conv -> *mask -> relu
    h = jnp.maximum(conv3(x, w1_ref, b1_ref) * m, 0.0)    # head[0]
    h = jnp.maximum(conv3(h, w2_ref, b2_ref) * m, 0.0)    # head[1]
    y = conv3(h, wc_ref, bc_ref) * m                      # cls_head (lane-padded)

    y = y.reshape(B, t_ext, cout)
    out_ref[...] = y[:, h_rows:h_rows + tt, :]            # drop halo rows


# -----------------------------------------------------------------------------
# Per-level pallas_call wrapper
# -----------------------------------------------------------------------------
def _cls_head_level(lens, x, lh, rh, params, tt):
    B, t_pad, cin = x.shape
    n_tiles = t_pad // tt
    cf = params["b1"].shape[-1]
    cout_pad = params["bc"].shape[-1]

    grid_spec = pltpu.PrefetchScalarGridSpec(
        num_scalar_prefetch=1,
        grid=(n_tiles,),
        in_specs=[
            pl.BlockSpec((B, tt, cin), lambda i, _l: (0, i, 0)),
            pl.BlockSpec((1, B, HALO, cin), lambda i, _l: (i, 0, 0, 0)),
            pl.BlockSpec((1, B, HALO, cin), lambda i, _l: (i, 0, 0, 0)),
            # weights / biases: constant index maps -> fetched once and kept
            # VMEM-resident across all T tiles
            pl.BlockSpec((3 * cin, cf), lambda i, _l: (0, 0)),
            pl.BlockSpec((1, cf), lambda i, _l: (0, 0)),
            pl.BlockSpec((3 * cf, cf), lambda i, _l: (0, 0)),
            pl.BlockSpec((1, cf), lambda i, _l: (0, 0)),
            pl.BlockSpec((3 * cf, cout_pad), lambda i, _l: (0, 0)),
            pl.BlockSpec((1, cout_pad), lambda i, _l: (0, 0)),
        ],
        out_specs=pl.BlockSpec((B, tt, cout_pad), lambda i, _l: (0, i, 0)),
    )

    # explicit VMEM budget: double-buffered input/output blocks + resident
    # weights + f32 intermediates, capped below v7x's 64 MiB physical VMEM.
    t_ext = tt + 2 * HALO
    blocks = 2 * (B * t_ext * cin * 2 + B * tt * cout_pad * 4)
    weights = 2 * 3 * cf * (cin + cf + cout_pad) + 4 * (2 * cf + cout_pad)
    interm = 12 * B * t_ext * max(3 * cin, 3 * cf, cout_pad) * 4
    vmem_limit = int(min(64 * 2 ** 20,
                         max(16 * 2 ** 20, 2 * (blocks + weights + interm))))

    return pl.pallas_call(
        _cls_head_kernel,
        out_shape=jax.ShapeDtypeStruct((B, t_pad, cout_pad), jnp.float32),
        grid_spec=grid_spec,
        compiler_params=pltpu.CompilerParams(
            dimension_semantics=("parallel",),     # T tiles are independent
            vmem_limit_bytes=vmem_limit),
    )(lens, x, lh, rh,
      params["w1"], params["b1"], params["w2"], params["b2"],
      params["wc"], params["bc"])


def cls_head_forward(fpn_feats, fpn_masks, params, tile_t=256):
    """fpn_feats: list of (B, C, T) f32; fpn_masks: list of (B, 1, T) bool
    (valid-length / prefix masks, as produced by the surrounding model).
    Returns tuple of per-level logits, each (B, 2, T) — PyTorch NCT layout."""
    assert len(fpn_feats) == len(fpn_masks)
    # TODO(synk): fuse all FPN levels into a single pallas_call (grid axis over
    # levels with scalar-prefetched offsets) to amortize launch overhead and
    # weight re-DMA for the short tail levels.
    out_logits = ()
    for feat, mask in zip(fpn_feats, fpn_masks):
        B, _cin, T = feat.shape
        # per-batch valid lengths (prefix-mask semantics) for in-kernel masking
        lens = jnp.sum(mask, axis=(1, 2)).astype(jnp.int32)

        tt = _round_up(min(tile_t, _round_up(T, T_ALIGN)), T_ALIGN)
        n_tiles = -(-T // tt)
        t_pad = n_tiles * tt

        # channel-last + bf16: channels on lanes, halved activation DMA bytes
        x = jnp.transpose(feat, (0, 2, 1)).astype(jnp.bfloat16)        # (B, T, C)
        xh = jnp.pad(x, ((0, 0), (HALO, HALO + t_pad - T), (0, 0)))    # zero halo/T pad
        x_main = xh[:, HALO:HALO + t_pad, :]                           # (B, t_pad, C)

        # per-tile halo rows (left/right HALO neighbors of each tile)
        starts = jnp.arange(n_tiles) * tt
        li = starts[:, None] + jnp.arange(HALO)[None, :]
        ri = starts[:, None] + tt + HALO + jnp.arange(HALO)[None, :]
        lh = jnp.transpose(xh[:, li, :], (1, 0, 2, 3))                 # (n_tiles,B,H,C)
        rh = jnp.transpose(xh[:, ri, :], (1, 0, 2, 3))

        out_pad = _cls_head_level(lens, x_main, lh, rh, params, tt)    # (B,t_pad,128)
        out = out_pad[:, :T, :COUT]                                    # drop pads
        out_logits += (jnp.transpose(out, (0, 2, 1)),)                 # (B, 2, T)
    return out_logits


# -----------------------------------------------------------------------------
# Deterministic parameter construction (synthetic init, matches module shapes)
# -----------------------------------------------------------------------------
def make_params(key, input_dim, feat_dim):
    k1, k2, k3 = jax.random.split(key, 3)
    prior_prob = 0.01
    cls_bias = -math.log((1.0 - prior_prob) / prior_prob)

    # per-tap weights (K, Cin, Cout); torch layout would be (Cout, Cin, K)
    w1 = 0.02 * jax.random.normal(k1, (3, input_dim, feat_dim), jnp.float32)
    w2 = 0.02 * jax.random.normal(k2, (3, feat_dim, feat_dim), jnp.float32)
    wc = 0.02 * jax.random.normal(k3, (3, feat_dim, COUT), jnp.float32)
    b1 = jnp.zeros((1, feat_dim), jnp.float32)
    b2 = jnp.zeros((1, feat_dim), jnp.float32)
    bc = jnp.full((1, COUT), cls_bias, jnp.float32)

    # kernel layout: taps stacked along the contraction dim (3*Cin, Cout) in
    # bf16 for the MXU; cls conv zero-padded to a lane-dense 128-wide output.
    wc_pad = jnp.zeros((3, feat_dim, COUT_PAD), jnp.float32).at[..., :COUT].set(wc)
    bc_pad = jnp.zeros((1, COUT_PAD), jnp.float32).at[:, :COUT].set(bc)
    return {
        # kernel params
        "w1": w1.reshape(3 * input_dim, feat_dim).astype(jnp.bfloat16),
        "b1": b1,
        "w2": w2.reshape(3 * feat_dim, feat_dim).astype(jnp.bfloat16),
        "b2": b2,
        "wc": wc_pad.reshape(3 * feat_dim, COUT_PAD).astype(jnp.bfloat16),
        "bc": bc_pad,
        # reference (f32, per-tap) params
        "w1_taps": w1, "w2_taps": w2, "wc_taps": wc, "bc2": bc,
    }


# -----------------------------------------------------------------------------
# Plain-JAX reference (independent path via lax.conv) for verification
# -----------------------------------------------------------------------------
def _ref_masked_conv(x_nct, w_kcd, b, mask):
    w_oik = jnp.transpose(w_kcd, (2, 1, 0))  # (Cout, Cin, K)
    y = jax.lax.conv_general_dilated(
        x_nct, w_oik, window_strides=(1,), padding=((1, 1),),
        dimension_numbers=("NCH", "OIH", "NCH"))
    y = y + b.reshape(1, -1, 1)
    return y * mask.astype(y.dtype)


def ref_forward(fpn_feats, fpn_masks, params):
    outs = ()
    for feat, mask in zip(fpn_feats, fpn_masks):
        h = jax.nn.relu(_ref_masked_conv(feat, params["w1_taps"], params["b1"], mask))
        h = jax.nn.relu(_ref_masked_conv(h, params["w2_taps"], params["b2"], mask))
        outs += (_ref_masked_conv(h, params["wc_taps"], params["bc2"], mask),)
    return outs


# -----------------------------------------------------------------------------
# Main
# -----------------------------------------------------------------------------
if __name__ == "__main__":
    key = jax.random.PRNGKey(0)
    B, input_dim, feat_dim = 2, 32, 32
    fpn_lens = [40, 20]          # fpn_levels = 2; small tiles below force the
                                 # multi-tile + halo path to be exercised

    kp, *kx = jax.random.split(key, 1 + 2 * len(fpn_lens))
    params = make_params(kp, input_dim, feat_dim)

    fpn_feats, fpn_masks = [], []
    for li, T in enumerate(fpn_lens):
        feat = jax.random.normal(kx[2 * li], (B, input_dim, T), jnp.float32)
        valid = jax.random.randint(kx[2 * li + 1], (B, 1, 1), T // 2, T + 1)
        mask = (jnp.arange(T)[None, None, :] < valid)    # valid-length prefix mask
        fpn_feats.append(feat)
        fpn_masks.append(mask)

    outs = cls_head_forward(fpn_feats, fpn_masks, params, tile_t=16)
    outs = jax.block_until_ready(outs)

    refs = ref_forward(fpn_feats, fpn_masks, params)
    for o, r in zip(outs, refs):
        assert o.shape == r.shape and o.dtype == jnp.float32
        assert jnp.allclose(o, r, rtol=2e-2, atol=2e-2), "mismatch vs reference"

    print("KERNEL_OK")
</pallas_src>

<mosaic_0001>
module attributes {stable_mosaic.version = 11 : i64} {
  func.func @_cls_head_kernel(%arg0: i32, %arg1: memref<2xi32, #tpu.memory_space<smem>>, %arg2: memref<2x16x32xbf16, #tpu.memory_space<vmem>>, %arg3: memref<1x2x16x32xbf16, #tpu.memory_space<vmem>>, %arg4: memref<1x2x16x32xbf16, #tpu.memory_space<vmem>>, %arg5: memref<96x32xbf16, #tpu.memory_space<vmem>>, %arg6: memref<1x32xf32, #tpu.memory_space<vmem>>, %arg7: memref<96x32xbf16, #tpu.memory_space<vmem>>, %arg8: memref<1x32xf32, #tpu.memory_space<vmem>>, %arg9: memref<96x128xbf16, #tpu.memory_space<vmem>>, %arg10: memref<1x128xf32, #tpu.memory_space<vmem>>, %arg11: memref<2x16x128xf32, #tpu.memory_space<vmem>>) attributes {dimension_semantics = [#tpu.dimension_semantics<parallel>], iteration_bounds = array<i64: 3>, scalar_prefetch = 1 : i64, scratch_operands = 0 : i64, tpu.core_type = #tpu.core_type<tc>, window_params = [{transform_indices = @transform_0, window_bounds = array<i64: 2, 16, 32>}, {transform_indices = @transform_1, window_bounds = array<i64: 1, 2, 16, 32>}, {transform_indices = @transform_2, window_bounds = array<i64: 1, 2, 16, 32>}, {pipeline_mode = #tpu.pipeline_mode<synchronous>, transform_indices = @transform_3, window_bounds = array<i64: 96, 32>}, {pipeline_mode = #tpu.pipeline_mode<synchronous>, transform_indices = @transform_4, window_bounds = array<i64: 1, 32>}, {pipeline_mode = #tpu.pipeline_mode<synchronous>, transform_indices = @transform_5, window_bounds = array<i64: 96, 32>}, {pipeline_mode = #tpu.pipeline_mode<synchronous>, transform_indices = @transform_6, window_bounds = array<i64: 1, 32>}, {pipeline_mode = #tpu.pipeline_mode<synchronous>, transform_indices = @transform_7, window_bounds = array<i64: 96, 128>}, {pipeline_mode = #tpu.pipeline_mode<synchronous>, transform_indices = @transform_8, window_bounds = array<i64: 1, 128>}, {transform_indices = @transform_9, window_bounds = array<i64: 2, 16, 128>}]} {
    %c0 = arith.constant 0 : index
    %c0_0 = arith.constant 0 : index
    %c0_1 = arith.constant 0 : index
    %c0_2 = arith.constant 0 : index
    %0 = vector.load %arg3[%c0, %c0_0, %c0_1, %c0_2] : memref<1x2x16x32xbf16, #tpu.memory_space<vmem>>, vector<1x2x16x32xbf16>
    %1 = vector.shape_cast %0 : vector<1x2x16x32xbf16> to vector<2x16x32xbf16>
    %c0_3 = arith.constant 0 : index
    %c0_4 = arith.constant 0 : index
    %c0_5 = arith.constant 0 : index
    %2 = vector.load %arg2[%c0_3, %c0_4, %c0_5] : memref<2x16x32xbf16, #tpu.memory_space<vmem>>, vector<2x16x32xbf16>
    %c0_6 = arith.constant 0 : index
    %c0_7 = arith.constant 0 : index
    %c0_8 = arith.constant 0 : index
    %c0_9 = arith.constant 0 : index
    %3 = vector.load %arg4[%c0_6, %c0_7, %c0_8, %c0_9] : memref<1x2x16x32xbf16, #tpu.memory_space<vmem>>, vector<1x2x16x32xbf16>
    %4 = vector.shape_cast %3 : vector<1x2x16x32xbf16> to vector<2x16x32xbf16>
    %5 = tpu.concatenate %1, %2, %4 in 1 : vector<2x16x32xbf16>, vector<2x16x32xbf16>, vector<2x16x32xbf16> -> vector<2x48x32xbf16>
    %6 = vector.shape_cast %5 : vector<2x48x32xbf16> to vector<96x32xbf16>
    %7 = arith.extf %6 : vector<96x32xbf16> to vector<96x32xf32>
    %c16_i32 = arith.constant 16 : i32
    %8 = arith.muli %arg0, %c16_i32 : i32
    %c16_i32_10 = arith.constant 16 : i32
    %9 = arith.subi %8, %c16_i32_10 : i32
    %10 = tpu.iota {dimensions = array<i32: 1>} : vector<2x48x1xi32>
    %11 = vector.broadcast %9 : i32 to vector<2x48x1xi32>
    %12 = arith.addi %10, %11 : vector<2x48x1xi32>
    %13 = tpu.iota {dimensions = array<i32: 0>} : vector<2x48x1xi32>
    %c0_i32 = arith.constant 0 : i32
    %14 = vector.broadcast %c0_i32 : i32 to vector<2x48x1xi32>
    %c0_i32_11 = arith.constant 0 : i32
    %15 = vector.broadcast %c0_i32_11 : i32 to vector<2x48x1xi32>
    %16 = arith.cmpi eq, %13, %15 : vector<2x48x1xi32>
    %c0_12 = arith.constant 0 : index
    %17 = memref.load %arg1[%c0_12] : memref<2xi32, #tpu.memory_space<smem>>
    %18 = vector.broadcast %17 : i32 to vector<2x48x1xi32>
    %19 = arith.select %16, %18, %14 : vector<2x48x1xi1>, vector<2x48x1xi32>
    %c1_i32 = arith.constant 1 : i32
    %20 = vector.broadcast %c1_i32 : i32 to vector<2x48x1xi32>
    %21 = arith.cmpi eq, %13, %20 : vector<2x48x1xi32>
    %c1 = arith.constant 1 : index
    %22 = memref.load %arg1[%c1] : memref<2xi32, #tpu.memory_space<smem>>
    %23 = vector.broadcast %22 : i32 to vector<2x48x1xi32>
    %24 = arith.select %21, %23, %19 : vector<2x48x1xi1>, vector<2x48x1xi32>
    %c0_i32_13 = arith.constant 0 : i32
    %25 = vector.broadcast %c0_i32_13 : i32 to vector<2x48x1xi32>
    %26 = arith.cmpi sge, %12, %25 : vector<2x48x1xi32>
    %27 = arith.cmpi slt, %12, %24 : vector<2x48x1xi32>
    %28 = arith.andi %26, %27 : vector<2x48x1xi1>
    %29 = arith.extui %28 : vector<2x48x1xi1> to vector<2x48x1xi32>
    %30 = arith.sitofp %29 : vector<2x48x1xi32> to vector<2x48x1xf32>
    %31 = vector.shape_cast %30 : vector<2x48x1xf32> to vector<96x1xf32>
    %c1_i32_14 = arith.constant 1 : i32
    %32 = tpu.dynamic_rotate %7 by %c1_i32_14 dim 0 : vector<96x32xf32>, i32 -> vector<96x32xf32>
    %c95_i32 = arith.constant 95 : i32
    %33 = tpu.dynamic_rotate %7 by %c95_i32 dim 0 : vector<96x32xf32>, i32 -> vector<96x32xf32>
    %34 = tpu.concatenate %32, %7, %33 in 1 : vector<96x32xf32>, vector<96x32xf32>, vector<96x32xf32> -> vector<96x96xf32>
    %35 = arith.truncf %34 : vector<96x96xf32> to vector<96x96xbf16>
    %c0_15 = arith.constant 0 : index
    %c0_16 = arith.constant 0 : index
    %36 = vector.load %arg5[%c0_15, %c0_16] : memref<96x32xbf16, #tpu.memory_space<vmem>>, vector<96x32xbf16>
    %cst = arith.constant dense<0.000000e+00> : vector<96x32xf32>
    %37 = tpu.matmul %35, %36, %cst {dimension_numbers = #tpu.dot_dimension_numbers<[1], [0], [0], [1], [0, 0, 1, 1], [], []>} : vector<96x96xbf16>, vector<96x32xbf16>, vector<96x32xf32> -> vector<96x32xf32>
    %c0_17 = arith.constant 0 : index
    %c0_18 = arith.constant 0 : index
    %38 = vector.load %arg6[%c0_17, %c0_18] : memref<1x32xf32, #tpu.memory_space<vmem>>, vector<1x32xf32>
    %39 = vector.broadcast %38 : vector<1x32xf32> to vector<96x32xf32>
    %40 = arith.addf %37, %39 : vector<96x32xf32>
    %41 = vector.broadcast %31 : vector<96x1xf32> to vector<96x32xf32>
    %42 = arith.mulf %40, %41 : vector<96x32xf32>
    %cst_19 = arith.constant 0.000000e+00 : f32
    %43 = vector.broadcast %cst_19 : f32 to vector<96x32xf32>
    %44 = arith.maximumf %42, %43 : vector<96x32xf32>
    %c1_i32_20 = arith.constant 1 : i32
    %45 = tpu.dynamic_rotate %44 by %c1_i32_20 dim 0 : vector<96x32xf32>, i32 -> vector<96x32xf32>
    %c95_i32_21 = arith.constant 95 : i32
    %46 = tpu.dynamic_rotate %44 by %c95_i32_21 dim 0 : vector<96x32xf32>, i32 -> vector<96x32xf32>
    %47 = tpu.concatenate %45, %44, %46 in 1 : vector<96x32xf32>, vector<96x32xf32>, vector<96x32xf32> -> vector<96x96xf32>
    %48 = arith.truncf %47 : vector<96x96xf32> to vector<96x96xbf16>
    %c0_22 = arith.constant 0 : index
    %c0_23 = arith.constant 0 : index
    %49 = vector.load %arg7[%c0_22, %c0_23] : memref<96x32xbf16, #tpu.memory_space<vmem>>, vector<96x32xbf16>
    %cst_24 = arith.constant dense<0.000000e+00> : vector<96x32xf32>
    %50 = tpu.matmul %48, %49, %cst_24 {dimension_numbers = #tpu.dot_dimension_numbers<[1], [0], [0], [1], [0, 0, 1, 1], [], []>} : vector<96x96xbf16>, vector<96x32xbf16>, vector<96x32xf32> -> vector<96x32xf32>
    %c0_25 = arith.constant 0 : index
    %c0_26 = arith.constant 0 : index
    %51 = vector.load %arg8[%c0_25, %c0_26] : memref<1x32xf32, #tpu.memory_space<vmem>>, vector<1x32xf32>
    %52 = vector.broadcast %51 : vector<1x32xf32> to vector<96x32xf32>
    %53 = arith.addf %50, %52 : vector<96x32xf32>
    %54 = vector.broadcast %31 : vector<96x1xf32> to vector<96x32xf32>
    %55 = arith.mulf %53, %54 : vector<96x32xf32>
    %cst_27 = arith.constant 0.000000e+00 : f32
    %56 = vector.broadcast %cst_27 : f32 to vector<96x32xf32>
    %57 = arith.maximumf %55, %56 : vector<96x32xf32>
    %c1_i32_28 = arith.constant 1 : i32
    %58 = tpu.dynamic_rotate %57 by %c1_i32_28 dim 0 : vector<96x32xf32>, i32 -> vector<96x32xf32>
    %c95_i32_29 = arith.constant 95 : i32
    %59 = tpu.dynamic_rotate %57 by %c95_i32_29 dim 0 : vector<96x32xf32>, i32 -> vector<96x32xf32>
    %60 = tpu.concatenate %58, %57, %59 in 1 : vector<96x32xf32>, vector<96x32xf32>, vector<96x32xf32> -> vector<96x96xf32>
    %61 = arith.truncf %60 : vector<96x96xf32> to vector<96x96xbf16>
    %c0_30 = arith.constant 0 : index
    %c0_31 = arith.constant 0 : index
    %62 = vector.load %arg9[%c0_30, %c0_31] : memref<96x128xbf16, #tpu.memory_space<vmem>>, vector<96x128xbf16>
    %cst_32 = arith.constant dense<0.000000e+00> : vector<96x128xf32>
    %63 = tpu.matmul %61, %62, %cst_32 {dimension_numbers = #tpu.dot_dimension_numbers<[1], [0], [0], [1], [0, 0, 1, 1], [], []>} : vector<96x96xbf16>, vector<96x128xbf16>, vector<96x128xf32> -> vector<96x128xf32>
    %c0_33 = arith.constant 0 : index
    %c0_34 = arith.constant 0 : index
    %64 = vector.load %arg10[%c0_33, %c0_34] : memref<1x128xf32, #tpu.memory_space<vmem>>, vector<1x128xf32>
    %65 = vector.broadcast %64 : vector<1x128xf32> to vector<96x128xf32>
    %66 = arith.addf %63, %65 : vector<96x128xf32>
    %67 = vector.broadcast %31 : vector<96x1xf32> to vector<96x128xf32>
    %68 = arith.mulf %66, %67 : vector<96x128xf32>
    %69 = vector.shape_cast %68 : vector<96x128xf32> to vector<2x48x128xf32>
    %70 = vector.extract_strided_slice %69 {offsets = [0, 16, 0], sizes = [2, 16, 128], strides = [1, 1, 1]} : vector<2x48x128xf32> to vector<2x16x128xf32>
    %c0_35 = arith.constant 0 : index
    %c0_36 = arith.constant 0 : index
    %c0_37 = arith.constant 0 : index
    %71 = vector.load %arg11[%c0_35, %c0_36, %c0_37] : memref<2x16x128xf32, #tpu.memory_space<vmem>>, vector<2x16x128xf32>
    tpu.vector_store %arg11[%c0_35, %c0_36, %c0_37], %70 {strides = array<i32>} : memref<2x16x128xf32, #tpu.memory_space<vmem>>, vector<2x16x128xf32>,
    return
  }
  func.func @transform_0(%arg0: i32, %arg1: memref<2xi32, #tpu.memory_space<smem>>) -> (i32, i32, i32) {
    %c0_i32 = arith.constant 0 : i32
    %c0_i32_0 = arith.constant 0 : i32
    %c0_i32_1 = arith.constant 0 : i32
    return %c0_i32, %arg0, %c0_i32_0 : i32, i32, i32
  }
  func.func @transform_1(%arg0: i32, %arg1: memref<2xi32, #tpu.memory_space<smem>>) -> (i32, i32, i32, i32) {
    %c0_i32 = arith.constant 0 : i32
    %c0_i32_0 = arith.constant 0 : i32
    %c0_i32_1 = arith.constant 0 : i32
    %c0_i32_2 = arith.constant 0 : i32
    return %arg0, %c0_i32, %c0_i32_0, %c0_i32_1 : i32, i32, i32, i32
  }
  func.func @transform_2(%arg0: i32, %arg1: memref<2xi32, #tpu.memory_space<smem>>) -> (i32, i32, i32, i32) {
    %c0_i32 = arith.constant 0 : i32
    %c0_i32_0 = arith.constant 0 : i32
    %c0_i32_1 = arith.constant 0 : i32
    %c0_i32_2 = arith.constant 0 : i32
    return %arg0, %c0_i32, %c0_i32_0, %c0_i32_1 : i32, i32, i32, i32
  }
  func.func @transform_3(%arg0: i32, %arg1: memref<2xi32, #tpu.memory_space<smem>>) -> (i32, i32) {
    %c0_i32 = arith.constant 0 : i32
    %c0_i32_0 = arith.constant 0 : i32
    %c0_i32_1 = arith.constant 0 : i32
    return %c0_i32, %c0_i32_0 : i32, i32
  }
  func.func @transform_4(%arg0: i32, %arg1: memref<2xi32, #tpu.memory_space<smem>>) -> (i32, i32) {
    %c0_i32 = arith.constant 0 : i32
    %c0_i32_0 = arith.constant 0 : i32
    %c0_i32_1 = arith.constant 0 : i32
    return %c0_i32, %c0_i32_0 : i32, i32
  }
  func.func @transform_5(%arg0: i32, %arg1: memref<2xi32, #tpu.memory_space<smem>>) -> (i32, i32) {
    %c0_i32 = arith.constant 0 : i32
    %c0_i32_0 = arith.constant 0 : i32
    %c0_i32_1 = arith.constant 0 : i32
    return %c0_i32, %c0_i32_0 : i32, i32
  }
  func.func @transform_6(%arg0: i32, %arg1: memref<2xi32, #tpu.memory_space<smem>>) -> (i32, i32) {
    %c0_i32 = arith.constant 0 : i32
    %c0_i32_0 = arith.constant 0 : i32
    %c0_i32_1 = arith.constant 0 : i32
    return %c0_i32, %c0_i32_0 : i32, i32
  }
  func.func @transform_7(%arg0: i32, %arg1: memref<2xi32, #tpu.memory_space<smem>>) -> (i32, i32) {
    %c0_i32 = arith.constant 0 : i32
    %c0_i32_0 = arith.constant 0 : i32
    %c0_i32_1 = arith.constant 0 : i32
    return %c0_i32, %c0_i32_0 : i32, i32
  }
  func.func @transform_8(%arg0: i32, %arg1: memref<2xi32, #tpu.memory_space<smem>>) -> (i32, i32) {
    %c0_i32 = arith.constant 0 : i32
    %c0_i32_0 = arith.constant 0 : i32
    %c0_i32_1 = arith.constant 0 : i32
    return %c0_i32, %c0_i32_0 : i32, i32
  }
  func.func @transform_9(%arg0: i32, %arg1: memref<2xi32, #tpu.memory_space<smem>>) -> (i32, i32, i32) {
    %c0_i32 = arith.constant 0 : i32
    %c0_i32_0 = arith.constant 0 : i32
    %c0_i32_1 = arith.constant 0 : i32
    return %c0_i32, %arg0, %c0_i32_0 : i32, i32, i32
  }
}

</mosaic_0001>

<llo_original>
// kernel: tpu_custom_call.1
$region0: #{tpu_custom_call.1}
  #allocation0 [shape = 'u32[]', space=smem, size = 0x4, offset = 0x4, fixed_abs, tag = 'smem constant byte address 0x4 - core index']
  #allocation1 [shape = 'u32[144,128]{1,0:T(1,128)}', space=vmem, size = 0x12000, scoped, tag = 'internal scratch']
  #allocation2 [shape = 's32[1]{0}', space=sflag, size = 0x4, scoped, tag = 'scoped memory for tpu_custom_call.1']
  #allocation3 [shape = 'u8[512]{0}', space=smem, size = 0x200, scoped, tag = 'prefetched SMEM operand 0']
  #allocation7 [shape = 's32[]', space=sflag, size = 0x4, offset = 0, fixed_abs, tag = 'sflag constant byte address 0x0 - dummy sync flag']
  %s0 = inlined_call_operand.vmem [shape: s32[2], index: 0, kind: input, shape index: {}]
  %s1 = inlined_call_operand.vmem [shape: bf16[2,48,32], index: 1, kind: input, shape index: {}]
  %s2 = inlined_call_operand.vmem [shape: bf16[3,2,16,32], index: 2, kind: input, shape index: {}]
  %s3 = inlined_call_operand.vmem [shape: bf16[3,2,16,32], index: 3, kind: input, shape index: {}]
  %s4 = inlined_call_operand.vmem [shape: bf16[96,32], index: 4, kind: input, shape index: {}]
  %s5 = inlined_call_operand.vmem [shape: f32[1,32], index: 5, kind: input, shape index: {}]
  %s6 = inlined_call_operand.vmem [shape: bf16[96,32], index: 6, kind: input, shape index: {}]
  %s7 = inlined_call_operand.vmem [shape: f32[1,32], index: 7, kind: input, shape index: {}]
  %s8 = inlined_call_operand.vmem [shape: bf16[96,128], index: 8, kind: input, shape index: {}]
  %s9 = inlined_call_operand.vmem [shape: f32[1,128], index: 9, kind: input, shape index: {}]
  %s10 = inlined_call_operand.hbm [shape: f32[2,48,128], index: 10, kind: output, shape index: {}]
  %s11 = sld [smem:[#allocation0]]
  $region110: #{tpu_custom_call.1} parent=0
    _
  %s13 = ssub.s32 1, %s11
  %s14 = scalar_select 0, %s13, %s11
  %s15 = sshll.u32 %s0, 4
  %s16 = int_to_ptr.vmem [resolvable:$true] %s15
  %18 = dma.vmem_to_smem %s16, 16, [#allocation3], [#allocation2]
  %19 = dma.done [#allocation2], 16
  %20 = sfence
  $region1: #{tpu_custom_call.1} parent=0
    #allocation4 [shape = 'u8[16384]{0}', space=vmem, size = 0x4000, scoped, tag = 'input window, operand 1']
    #allocation5 [shape = 'u8[32768]{0}', space=vmem, size = 0x8000, scoped, tag = 'output window, operand 0']
    #allocation6 [shape = 's32[2]{0}', space=sflag, size = 0x8, scoped, tag = 'scoped memory for tpu_custom_call.1']
    %21 = vsyncpa [#allocation6], 0
    %s22 = scalar_lea.sflag [#allocation6], 1
    %23 = vsyncpa %s22, 0
    loop: start=0, step=1, limit=5
    $region2: #{tpu_custom_call.1} parent=1 // loop_pre_header
      _
    $region3: #{tpu_custom_call.1} parent=1 // loop_header
      %s25 = sphi 0, %s29
      %p26 = scmp.ge.s32.totalorder %s25, 5
      %s35 = sphi 0, %s37
      %s38 = sphi 0, %s35
      %s39 = sphi 0, %s38
      %s55 = sphi 0, %s39
      %s61 = sphi 0, %s63
      %s64 = sphi 0, %s61
      %s65 = sphi 0, %s64
      %s81 = sphi 0, %s65
      %s87 = sphi 0, %s89
      %s90 = sphi 0, %s87
      %s91 = sphi 0, %s90
      %s107 = sphi 0, %s91
      %s111 = sphi 0, %s111
      %s113 = sphi 0, %s111
      %s114 = sphi 0, %s113
      %s128 = sphi 0, %s114
      %s132 = sphi 0, %s132
      %s134 = sphi 0, %s132
      %s135 = sphi 0, %s134
      %s149 = sphi 0, %s135
      %s153 = sphi 0, %s153
      %s155 = sphi 0, %s153
      %s156 = sphi 0, %s155
      %s170 = sphi 0, %s156
      %s174 = sphi 0, %s174
      %s176 = sphi 0, %s174
      %s177 = sphi 0, %s176
      %s191 = sphi 0, %s177
      %s195 = sphi 0, %s195
      %s197 = sphi 0, %s195
      %s198 = sphi 0, %s197
      %s212 = sphi 0, %s198
      %s216 = sphi 0, %s216
      %s218 = sphi 0, %s216
      %s219 = sphi 0, %s218
      %s233 = sphi 0, %s219
      %s239 = sphi 0, %s241
      %s242 = sphi 0, %s239
      %s243 = sphi 0, %s242
      %s259 = sphi 0, %s243
    $region4: #{tpu_custom_call.1} parent=1 // loop_header_branch
      %28 = sbr.rel (%p26) target = $region8
    $region5: #{tpu_custom_call.1} parent=1 // loop_body
      %s30 = ssub.s32 %s25, 1
      %s31 = ssub.s32 %s25, 2
      %s32 = sadd.s32 %s25, 1
      %s33 = ssub.s32 %s25, %s32
      %p34 = scmp.eq.s32.totalorder %s33, 0
      %s36 = sadd.s32 %s35, 1
      %s37 = scalar_select %p34, %s35, %s36
      %p40 = pneg %p34
      %p41 = scmp.eq.s32.totalorder %s25, 2
      %p42 = por %p40, %p41
      %p43 = scmp.ne.s32.totalorder %s35, %s38
      %p44 = scmp.eq.s32.totalorder %s25, 0
      %p45 = por %p43, %p44
      %p46 = scmp.ne.s32.totalorder %s35, %s38
      %p47 = scmp.eq.s32.totalorder %s30, 2
      %p48 = por %p46, %p47
      %p49 = scmp.ne.s32.totalorder %s38, %s39
      %p50 = scmp.eq.s32.totalorder %s30, 0
      %p51 = por %p49, %p50
      %p52 = scmp.ne.s32.totalorder %s38, %s39
      %p53 = scmp.eq.s32.totalorder %s31, 2
      %p54 = por %p52, %p53
      %p56 = scmp.ne.s32.totalorder %s39, %s55
      %p57 = scmp.eq.s32.totalorder %s31, 0
      %p58 = por %p56, %p57
      %s59 = ssub.s32 %s25, %s32
      %p60 = scmp.eq.s32.totalorder %s59, 0
      %s62 = sadd.s32 %s61, 1
      %s63 = scalar_select %p60, %s61, %s62
      %p66 = pneg %p60
      %p67 = scmp.eq.s32.totalorder %s25, 2
      %p68 = por %p66, %p67
      %p69 = scmp.ne.s32.totalorder %s61, %s64
      %p70 = scmp.eq.s32.totalorder %s25, 0
      %p71 = por %p69, %p70
      %p72 = scmp.ne.s32.totalorder %s61, %s64
      %p73 = scmp.eq.s32.totalorder %s30, 2
      %p74 = por %p72, %p73
      %p75 = scmp.ne.s32.totalorder %s64, %s65
      %p76 = scmp.eq.s32.totalorder %s30, 0
      %p77 = por %p75, %p76
      %p78 = scmp.ne.s32.totalorder %s64, %s65
      %p79 = scmp.eq.s32.totalorder %s31, 2
      %p80 = por %p78, %p79
      %p82 = scmp.ne.s32.totalorder %s65, %s81
      %p83 = scmp.eq.s32.totalorder %s31, 0
      %p84 = por %p82, %p83
      %s85 = ssub.s32 %s25, %s32
      %p86 = scmp.eq.s32.totalorder %s85, 0
      %s88 = sadd.s32 %s87, 1
      %s89 = scalar_select %p86, %s87, %s88
      %p92 = pneg %p86
      %p93 = scmp.eq.s32.totalorder %s25, 2
      %p94 = por %p92, %p93
      %p95 = scmp.ne.s32.totalorder %s87, %s90
      %p96 = scmp.eq.s32.totalorder %s25, 0
      %p97 = por %p95, %p96
      %p98 = scmp.ne.s32.totalorder %s87, %s90
      %p99 = scmp.eq.s32.totalorder %s30, 2
      %p100 = por %p98, %p99
      %p101 = scmp.ne.s32.totalorder %s90, %s91
      %p102 = scmp.eq.s32.totalorder %s30, 0
      %p103 = por %p101, %p102
      %p104 = scmp.ne.s32.totalorder %s90, %s91
      %p105 = scmp.eq.s32.totalorder %s31, 2
      %p106 = por %p104, %p105
      %p108 = scmp.ne.s32.totalorder %s91, %s107
      %p109 = scmp.eq.s32.totalorder %s31, 0
      %p110 = por %p108, %p109
      %s112 = sadd.s32 %s111, 1
      %p115 = scmp.eq.s32.totalorder %s25, 2
      %p116 = scmp.ne.s32.totalorder %s111, %s113
      %p117 = scmp.eq.s32.totalorder %s25, 0
      %p118 = por %p116, %p117
      %p119 = scmp.ne.s32.totalorder %s111, %s113
      %p120 = scmp.eq.s32.totalorder %s30, 2
      %p121 = por %p119, %p120
      %p122 = scmp.ne.s32.totalorder %s113, %s114
      %p123 = scmp.eq.s32.totalorder %s30, 0
      %p124 = por %p122, %p123
      %p125 = scmp.ne.s32.totalorder %s113, %s114
      %p126 = scmp.eq.s32.totalorder %s31, 2
      %p127 = por %p125, %p126
      %p129 = scmp.ne.s32.totalorder %s114, %s128
      %p130 = scmp.eq.s32.totalorder %s31, 0
      %p131 = por %p129, %p130
      %s133 = sadd.s32 %s132, 1
      %p136 = scmp.eq.s32.totalorder %s25, 2
      %p137 = scmp.ne.s32.totalorder %s132, %s134
      %p138 = scmp.eq.s32.totalorder %s25, 0
      %p139 = por %p137, %p138
      %p140 = scmp.ne.s32.totalorder %s132, %s134
      %p141 = scmp.eq.s32.totalorder %s30, 2
      %p142 = por %p140, %p141
      %p143 = scmp.ne.s32.totalorder %s134, %s135
      %p144 = scmp.eq.s32.totalorder %s30, 0
      %p145 = por %p143, %p144
      %p146 = scmp.ne.s32.totalorder %s134, %s135
      %p147 = scmp.eq.s32.totalorder %s31, 2
      %p148 = por %p146, %p147
      %p150 = scmp.ne.s32.totalorder %s135, %s149
      %p151 = scmp.eq.s32.totalorder %s31, 0
      %p152 = por %p150, %p151
      %s154 = sadd.s32 %s153, 1
      %p157 = scmp.eq.s32.totalorder %s25, 2
      %p158 = scmp.ne.s32.totalorder %s153, %s155
      %p159 = scmp.eq.s32.totalorder %s25, 0
      %p160 = por %p158, %p159
      %p161 = scmp.ne.s32.totalorder %s153, %s155
      %p162 = scmp.eq.s32.totalorder %s30, 2
      %p163 = por %p161, %p162
      %p164 = scmp.ne.s32.totalorder %s155, %s156
      %p165 = scmp.eq.s32.totalorder %s30, 0
      %p166 = por %p164, %p165
      %p167 = scmp.ne.s32.totalorder %s155, %s156
      %p168 = scmp.eq.s32.totalorder %s31, 2
      %p169 = por %p167, %p168
      %p171 = scmp.ne.s32.totalorder %s156, %s170
      %p172 = scmp.eq.s32.totalorder %s31, 0
      %p173 = por %p171, %p172
      %s175 = sadd.s32 %s174, 1
      %p178 = scmp.eq.s32.totalorder %s25, 2
      %p179 = scmp.ne.s32.totalorder %s174, %s176
      %p180 = scmp.eq.s32.totalorder %s25, 0
      %p181 = por %p179, %p180
      %p182 = scmp.ne.s32.totalorder %s174, %s176
      %p183 = scmp.eq.s32.totalorder %s30, 2
      %p184 = por %p182, %p183
      %p185 = scmp.ne.s32.totalorder %s176, %s177
      %p186 = scmp.eq.s32.totalorder %s30, 0
      %p187 = por %p185, %p186
      %p188 = scmp.ne.s32.totalorder %s176, %s177
      %p189 = scmp.eq.s32.totalorder %s31, 2
      %p190 = por %p188, %p189
      %p192 = scmp.ne.s32.totalorder %s177, %s191
      %p193 = scmp.eq.s32.totalorder %s31, 0
      %p194 = por %p192, %p193
      %s196 = sadd.s32 %s195, 1
      %p199 = scmp.eq.s32.totalorder %s25, 2
      %p200 = scmp.ne.s32.totalorder %s195, %s197
      %p201 = scmp.eq.s32.totalorder %s25, 0
      %p202 = por %p200, %p201
      %p203 = scmp.ne.s32.totalorder %s195, %s197
      %p204 = scmp.eq.s32.totalorder %s30, 2
      %p205 = por %p203, %p204
      %p206 = scmp.ne.s32.totalorder %s197, %s198
      %p207 = scmp.eq.s32.totalorder %s30, 0
      %p208 = por %p206, %p207
      %p209 = scmp.ne.s32.totalorder %s197, %s198
      %p210 = scmp.eq.s32.totalorder %s31, 2
      %p211 = por %p209, %p210
      %p213 = scmp.ne.s32.totalorder %s198, %s212
      %p214 = scmp.eq.s32.totalorder %s31, 0
      %p215 = por %p213, %p214
      %s217 = sadd.s32 %s216, 1
      %p220 = scmp.eq.s32.totalorder %s25, 2
      %p221 = scmp.ne.s32.totalorder %s216, %s218
      %p222 = scmp.eq.s32.totalorder %s25, 0
      %p223 = por %p221, %p222
      %p224 = scmp.ne.s32.totalorder %s216, %s218
      %p225 = scmp.eq.s32.totalorder %s30, 2
      %p226 = por %p224, %p225
      %p227 = scmp.ne.s32.totalorder %s218, %s219
      %p228 = scmp.eq.s32.totalorder %s30, 0
      %p229 = por %p227, %p228
      %p230 = scmp.ne.s32.totalorder %s218, %s219
      %p231 = scmp.eq.s32.totalorder %s31, 2
      %p232 = por %p230, %p231
      %p234 = scmp.ne.s32.totalorder %s219, %s233
      %p235 = scmp.eq.s32.totalorder %s31, 0
      %p236 = por %p234, %p235
      %s237 = ssub.s32 %s25, %s32
      %p238 = scmp.eq.s32.totalorder %s237, 0
      %s240 = sadd.s32 %s239, 1
      %s241 = scalar_select %p238, %s239, %s240
      %p244 = pneg %p238
      %p245 = scmp.eq.s32.totalorder %s25, 2
      %p246 = por %p244, %p245
      %p247 = scmp.ne.s32.totalorder %s239, %s242
      %p248 = scmp.eq.s32.totalorder %s25, 0
      %p249 = por %p247, %p248
      %p250 = scmp.ne.s32.totalorder %s239, %s242
      %p251 = scmp.eq.s32.totalorder %s30, 2
      %p252 = por %p250, %p251
      %p253 = scmp.ne.s32.totalorder %s242, %s243
      %p254 = scmp.eq.s32.totalorder %s30, 0
      %p255 = por %p253, %p254
      %p256 = scmp.ne.s32.totalorder %s242, %s243
      %p257 = scmp.eq.s32.totalorder %s31, 2
      %p258 = por %p256, %p257
      %p260 = scmp.ne.s32.totalorder %s243, %s259
      %p261 = scmp.eq.s32.totalorder %s31, 0
      %p262 = por %p260, %p261
      %p263 = scmp.le.s32.totalorder 1, %s25
      %p264 = scmp.lt.s32.totalorder %s25, 4
      %p265 = pnand %p263, %p264
      %p266 = pneg %p265
      // Predicated region
      $region9: #{tpu_custom_call.1} parent=5 // pred_check
        _
      $region10: #{tpu_custom_call.1} parent=5 // pred_check_branch
        %268 = sbr.rel (%p265) target = $region12
      $region11: #{tpu_custom_call.1} parent=5 // pred_region
        %s269 = ssub.s32 %s25, 1
        // Predicated region
        $region13: #{tpu_custom_call.1} parent=11 // pred_check
          %p270 = pneg %p124
        $region14: #{tpu_custom_call.1} parent=11 // pred_check_branch
          %272 = sbr.rel (%p270) target = $region16
        $region15: #{tpu_custom_call.1} parent=11 // pred_region
          _
        $region16: #{tpu_custom_call.1} parent=11 // pred_fallthru
          _
        // Predicated region
        $region17: #{tpu_custom_call.1} parent=11 // pred_check
          %p273 = pneg %p145
        $region18: #{tpu_custom_call.1} parent=11 // pred_check_branch
          %275 = sbr.rel (%p273) target = $region20
        $region19: #{tpu_custom_call.1} parent=11 // pred_region
          _
        $region20: #{tpu_custom_call.1} parent=11 // pred_fallthru
          _
        // Predicated region
        $region21: #{tpu_custom_call.1} parent=11 // pred_check
          %p276 = pneg %p166
        $region22: #{tpu_custom_call.1} parent=11 // pred_check_branch
          %278 = sbr.rel (%p276) target = $region24
        $region23: #{tpu_custom_call.1} parent=11 // pred_region
          _
        $region24: #{tpu_custom_call.1} parent=11 // pred_fallthru
          _
        // Predicated region
        $region25: #{tpu_custom_call.1} parent=11 // pred_check
          %p279 = pneg %p187
        $region26: #{tpu_custom_call.1} parent=11 // pred_check_branch
          %281 = sbr.rel (%p279) target = $region28
        $region27: #{tpu_custom_call.1} parent=11 // pred_region
          _
        $region28: #{tpu_custom_call.1} parent=11 // pred_fallthru
          _
        // Predicated region
        $region29: #{tpu_custom_call.1} parent=11 // pred_check
          %p282 = pneg %p208
        $region30: #{tpu_custom_call.1} parent=11 // pred_check_branch
          %284 = sbr.rel (%p282) target = $region32
        $region31: #{tpu_custom_call.1} parent=11 // pred_region
          _
        $region32: #{tpu_custom_call.1} parent=11 // pred_fallthru
          _
        // Predicated region
        $region33: #{tpu_custom_call.1} parent=11 // pred_check
          %p285 = pneg %p229
        $region34: #{tpu_custom_call.1} parent=11 // pred_check_branch
          %287 = sbr.rel (%p285) target = $region36
        $region35: #{tpu_custom_call.1} parent=11 // pred_region
          _
        $region36: #{tpu_custom_call.1} parent=11 // pred_fallthru
          _
      $region12: #{tpu_custom_call.1} parent=5 // pred_fallthru
        _
      %p288 = scmp.lt.s32.totalorder %s25, 3
      // Predicated region
      $region37: #{tpu_custom_call.1} parent=5 // pred_check
        %p289 = pneg %p288
      $region38: #{tpu_custom_call.1} parent=5 // pred_check_branch
        %291 = sbr.rel (%p289) target = $region40
      $region39: #{tpu_custom_call.1} parent=5 // pred_region
        // Predicated region
        $region41: #{tpu_custom_call.1} parent=39 // pred_check
          %p292 = pneg %p45
        $region42: #{tpu_custom_call.1} parent=39 // pred_check_branch
          %294 = sbr.rel (%p292) target = $region44
        $region43: #{tpu_custom_call.1} parent=39 // pred_region
          %s295 = sand.u32 %s35, 1
          %s296 = sand.u32 %s35, 1
          %s297 = smul.addr %s296, 16
          %s298 = scalar_lea.vmem [#allocation4], %s297
          %s299 = smul.u32 2, %s25
          %s300 = smul.addr %s299, 4
          %s301 = scalar_lea.vmem %s1, %s300
          // Predicated region
          $region45: #{tpu_custom_call.1} parent=43 // pred_check
            _
          $region46: #{tpu_custom_call.1} parent=43 // pred_check_branch
            %303 = sbr.rel (0) target = $region48
          $region47: #{tpu_custom_call.1} parent=43 // pred_region
            // Predicated region
            $region49: #{tpu_custom_call.1} parent=47 // pred_check
              _
            $region50: #{tpu_custom_call.1} parent=47 // pred_check_branch
              %305 = sbr.rel target = $region52
            $region51: #{tpu_custom_call.1} parent=47 // pred_region
              // Predicated region
              $region64: #{tpu_custom_call.1} parent=51 // pred_check
                _
              $region65: #{tpu_custom_call.1} parent=51 // pred_check_branch
                %326 = sbr.rel (0) target = $region67
              $region66: #{tpu_custom_call.1} parent=51 // pred_region
                loop: start=0, step=1, limit=1
                $region68: #{tpu_custom_call.1} parent=66 // loop_pre_header
                  _
                $region69: #{tpu_custom_call.1} parent=66 // loop_header
                  %s328 = sphi 0, %s332
                  %p329 = scmp.ge.s32.totalorder %s328, 1
                  %s333 = sphi %s301, %s301
                  %s334 = sphi %s298, %s298
                $region70: #{tpu_custom_call.1} parent=66 // loop_header_branch
                  %331 = sbr.rel (%p329) target = $region74
                $region71: #{tpu_custom_call.1} parent=66 // loop_body
                  _
                $region72: #{tpu_custom_call.1} parent=66 // loop_footer
                  %s332 = sadd.s32 1, %s328
                $region73: #{tpu_custom_call.1} parent=66 // loop_footer_branch
                  %327 = sbr.rel target = $region69
                $region74: #{tpu_custom_call.1} parent=66 // loop_exit
                  _
                loop: start=0, step=1, limit=1
                $region75: #{tpu_custom_call.1} parent=66 // loop_pre_header
                  _
                $region76: #{tpu_custom_call.1} parent=66 // loop_header
                  %s337 = sphi 0, %s341
                  %p338 = scmp.ge.s32.totalorder %s337, 1
                  %s342 = sphi %s301, %s301
                  %s343 = sphi %s298, %s298
                $region77: #{tpu_custom_call.1} parent=66 // loop_header_branch
                  %340 = sbr.rel (%p338) target = $region81
                $region78: #{tpu_custom_call.1} parent=66 // loop_body
                  %v344 = vld [vmem:[%s342] sm:$0xf]
                  %345 = vst [vmem:[%s343] sm:$0xf] %v344
                  %v346 = vld [vmem:[%s342 + $0x4] sm:$0xf]
                  %347 = vst [vmem:[%s343 + $0x4] sm:$0xf] %v346
                  %v348 = vld [vmem:[%s342 + $0x18] sm:$0xf]
                  %349 = vst [vmem:[%s343 + $0x8] sm:$0xf] %v348
                  %v350 = vld [vmem:[%s342 + $0x1c] sm:$0xf]
                  %351 = vst [vmem:[%s343 + $0xc] sm:$0xf] %v350
                $region79: #{tpu_custom_call.1} parent=66 // loop_footer
                  %s341 = sadd.s32 1, %s337
                $region80: #{tpu_custom_call.1} parent=66 // loop_footer_branch
                  %336 = sbr.rel target = $region76
                $region81: #{tpu_custom_call.1} parent=66 // loop_exit
                  _
              $region67: #{tpu_custom_call.1} parent=51 // pred_fallthru
                _
            $region52: #{tpu_custom_call.1} parent=47 // pred_fallthru
              _
            // Predicated region
            $region53: #{tpu_custom_call.1} parent=47 // pred_check
              _
            $region54: #{tpu_custom_call.1} parent=47 // pred_check_branch
              %307 = sbr.rel (0) target = $region56
            $region55: #{tpu_custom_call.1} parent=47 // pred_region
              loop: start=0, step=1, limit=1
              $region57: #{tpu_custom_call.1} parent=55 // loop_pre_header
                _
              $region58: #{tpu_custom_call.1} parent=55 // loop_header
                %s310 = sphi 0, %s314
                %p311 = scmp.ge.s32.totalorder %s310, 1
                %s315 = sphi %s301, %s301
                %s316 = sphi %s298, %s298
              $region59: #{tpu_custom_call.1} parent=55 // loop_header_branch
                %313 = sbr.rel (%p311) target = $region63
              $region60: #{tpu_custom_call.1} parent=55 // loop_body
                %v317 = vld [vmem:[%s315] sm:$0xf]
                %318 = vst [vmem:[%s316] sm:$0xf] %v317
                %v319 = vld [vmem:[%s315 + $0x4] sm:$0xf]
                %320 = vst [vmem:[%s316 + $0x4] sm:$0xf] %v319
                %v321 = vld [vmem:[%s315 + $0x18] sm:$0xf]
                %322 = vst [vmem:[%s316 + $0x8] sm:$0xf] %v321
                %v323 = vld [vmem:[%s315 + $0x1c] sm:$0xf]
                %324 = vst [vmem:[%s316 + $0xc] sm:$0xf] %v323
              $region61: #{tpu_custom_call.1} parent=55 // loop_footer
                %s314 = sadd.s32 1, %s310
              $region62: #{tpu_custom_call.1} parent=55 // loop_footer_branch
                %309 = sbr.rel target = $region58
              $region63: #{tpu_custom_call.1} parent=55 // loop_exit
                _
            $region56: #{tpu_custom_call.1} parent=47 // pred_fallthru
              _
          $region48: #{tpu_custom_call.1} parent=43 // pred_fallthru
            _
          %352 = vnop
        $region44: #{tpu_custom_call.1} parent=39 // pred_fallthru
          _
        // Predicated region
        $region82: #{tpu_custom_call.1} parent=39 // pred_check
          %p353 = pneg %p71
        $region83: #{tpu_custom_call.1} parent=39 // pred_check_branch
          %355 = sbr.rel (%p353) target = $region85
        $region84: #{tpu_custom_call.1} parent=39 // pred_region
          %p356 = scmp.lt.s32.totalorder %s25, 2
          %s357 = scalar_select %p356, %s25, 2
          %s358 = smul.addr %s357, 4
          %s359 = smul.addr %s358, 4
          %s360 = scalar_lea.vmem %s2, %s359
        $region85: #{tpu_custom_call.1} parent=39 // pred_fallthru
          _
        // Predicated region
        $region86: #{tpu_custom_call.1} parent=39 // pred_check
          %p361 = pneg %p97
        $region87: #{tpu_custom_call.1} parent=39 // pred_check_branch
          %363 = sbr.rel (%p361) target = $region89
        $region88: #{tpu_custom_call.1} parent=39 // pred_region
          %p364 = scmp.lt.s32.totalorder %s25, 2
          %s365 = scalar_select %p364, %s25, 2
          %s366 = smul.addr %s365, 4
          %s367 = smul.addr %s366, 4
          %s368 = scalar_lea.vmem %s3, %s367
        $region89: #{tpu_custom_call.1} parent=39 // pred_fallthru
          _
      $region40: #{tpu_custom_call.1} parent=5 // pred_fallthru
        _
      %p369 = scmp.le.s32.totalorder 1, %s25
      %p370 = scmp.lt.s32.totalorder %s25, 4
      %p371 = pnand %p369, %p370
      %p372 = pneg %p371
      // Predicated region
      $region90: #{tpu_custom_call.1} parent=5 // pred_check
        _
      $region91: #{tpu_custom_call.1} parent=5 // pred_check_branch
        %374 = sbr.rel (%p371) target = $region93
      $region92: #{tpu_custom_call.1} parent=5 // pred_region
        %s375 = ssub.s32 %s25, 1
        %s376 = sand.u32 %s38, 1
        %s377 = sand.u32 %s38, 1
        %s378 = smul.addr %s377, 16
        %s379 = scalar_lea.vmem [#allocation4], %s378
        // Predicated region
        $region94: #{tpu_custom_call.1} parent=92 // pred_check
          %p380 = pneg %p51
        $region95: #{tpu_custom_call.1} parent=92 // pred_check_branch
          %382 = sbr.rel (%p380) target = $region97
        $region96: #{tpu_custom_call.1} parent=92 // pred_region
          _
        $region97: #{tpu_custom_call.1} parent=92 // pred_fallthru
          _
        %s383 = sand.u32 %s38, 1
        %s384 = sand.u32 %s38, 1
        %s385 = smul.addr %s384, 16
        %s386 = scalar_lea.vmem [#allocation4], %s385
        %p387 = pneg %p51
        %p388 = pneg %p48
        %p389 = scmp.lt.s32.totalorder %s30, 2
        %s390 = scalar_select %p389, %s30, 2
        %s391 = smul.addr %s390, 4
        %s392 = smul.addr %s391, 4
        %s393 = scalar_lea.vmem %s2, %s392
        %p394 = pneg %p77
        %p395 = pneg %p74
        %p396 = scmp.lt.s32.totalorder %s30, 2
        %s397 = scalar_select %p396, %s30, 2
        %s398 = smul.addr %s397, 4
        %s399 = smul.addr %s398, 4
        %s400 = scalar_lea.vmem %s3, %s399
        %p401 = pneg %p103
        %p402 = pneg %p100
        %p403 = pneg %p124
        %p404 = pneg %p121
        %p405 = pneg %p145
        %p406 = pneg %p142
        %p407 = pneg %p166
        %p408 = pneg %p163
        %p409 = pneg %p187
        %p410 = pneg %p184
        %p411 = pneg %p208
        %p412 = pneg %p205
        %p413 = pneg %p229
        %p414 = pneg %p226
        %p415 = pneg %p255
        %p416 = pneg %p252
        %s417 = sand.u32 %s242, 1
        %s418 = scalar_lea.sflag [#allocation6], %s417
        %s419 = sand.u32 %s242, 1
        %s420 = smul.addr %s419, 32
        %s421 = scalar_lea.vmem [#allocation5], %s420
        %s422 = smul.u32 2, %s30
        %p423 = scmp.lt.s32.totalorder %s30, 2
        %s424 = scalar_select %p423, %s30, 2
        %s425 = smul.addr %s424, 4
        %s426 = smul.addr %s425, 4
        %s427 = scalar_lea.vmem %s2, %s426
        %p428 = scmp.lt.s32.totalorder %s30, 2
        %s429 = scalar_select %p428, %s30, 2
        %s430 = smul.addr %s429, 4
        %s431 = smul.addr %s430, 4
        %s432 = scalar_lea.vmem %s3, %s431
        %s433 = smul.u32 2, %s30
        %v435 = vld [vmem:[%s427] sm:$0xf]
        %v436 = vld [vmem:[%s427 + $0x4] sm:$0xf]
        %v437 = vld [vmem:[%s427 + $0x8] sm:$0xf]
        %v438 = vld [vmem:[%s427 + $0xc] sm:$0xf]
        %v439 = vld [vmem:[%s379] sm:$0xf]
        %v440 = vld [vmem:[%s379 + $0x4] sm:$0xf]
        %v441 = vld [vmem:[%s379 + $0x8] sm:$0xf]
        %v442 = vld [vmem:[%s379 + $0xc] sm:$0xf]
        %v443 = vld [vmem:[%s432] sm:$0xf]
        %v444 = vld [vmem:[%s432 + $0x4] sm:$0xf]
        %v445 = vld [vmem:[%s432 + $0x8] sm:$0xf]
        %v446 = vld [vmem:[%s432 + $0xc] sm:$0xf]
        %v451 = vunpack.c.l.b16 %v435
        %v452 = vunpack.c.l.b16 %v436
        %v453 = vunpack.c.l.b16 %v437
        %v454 = vunpack.c.l.b16 %v438
        %v455 = vpack.c.b16 %v452, %v451
        %v456 = vpack.c.b16 %v454, %v453
        %v463 = vunpack.c.l.b16 %v439
        %v464 = vunpack.c.l.b16 %v440
        %v465 = vunpack.c.l.b16 %v441
        %v466 = vunpack.c.l.b16 %v442
        %v467 = vpack.c.b16 %v464, %v463
        %v468 = vpack.c.b16 %v466, %v465
        %v475 = vunpack.c.l.b16 %v443
        %v476 = vunpack.c.l.b16 %v444
        %v477 = vunpack.c.l.b16 %v445
        %v478 = vunpack.c.l.b16 %v446
        %v479 = vpack.c.b16 %v476, %v475
        %v480 = vpack.c.b16 %v478, %v477
        %v483 = vunpack.c.l.bf16 %v455
        %v484 = vunpack.c.h.bf16 %v455
        %v485 = vunpack.c.l.bf16 %v467
        %v486 = vunpack.c.h.bf16 %v467
        %v487 = vunpack.c.l.bf16 %v479
        %v488 = vunpack.c.h.bf16 %v479
        %v489 = vunpack.c.l.bf16 %v456
        %v490 = vunpack.c.h.bf16 %v456
        %v491 = vunpack.c.l.bf16 %v468
        %v492 = vunpack.c.h.bf16 %v468
        %v493 = vunpack.c.l.bf16 %v480
        %v494 = vunpack.c.h.bf16 %v480
        %s495 = smul.u32 %s30, 16
        %s496 = ssub.s32 %s495, 16
        %v497 = vlaneseq
        %v498 = vshrl.u32 %v497, 7
        %v499 = vadd.s32 %v498, 8
        %v500 = vadd.s32 %v498, 16
        %v501 = vadd.s32 %v498, 24
        %v502 = vadd.s32 %v498, 32
        %v503 = vadd.s32 %v498, 40
        %v504 = vstv %s496
        %v505 = vadd.s32 %v498, %v504
        %v506 = vadd.s32 %v499, %v504
        %v507 = vadd.s32 %v500, %v504
        %v508 = vadd.s32 %v501, %v504
        %v509 = vadd.s32 %v502, %v504
        %v510 = vadd.s32 %v503, %v504
        %s511 = sld [smem:[#allocation3]]
        %v512 = vstv %s511
        %s513 = sld [smem:[#allocation3 + $0x1]]
        %v514 = vstv %s513
        %vm515 = vcmp.ge.s32.totalorder %v505, 0
        %vm516 = vcmp.ge.s32.totalorder %v506, 0
        %vm517 = vcmp.ge.s32.totalorder %v507, 0
        %vm518 = vcmp.ge.s32.totalorder %v508, 0
        %vm519 = vcmp.ge.s32.totalorder %v509, 0
        %vm520 = vcmp.ge.s32.totalorder %v510, 0
        %vm521 = vcmp.lt.s32.totalorder %v505, %v512
        %vm522 = vcmp.lt.s32.totalorder %v506, %v512
        %vm523 = vcmp.lt.s32.totalorder %v507, %v512
        %vm524 = vcmp.lt.s32.totalorder %v508, %v512
        %vm525 = vcmp.lt.s32.totalorder %v509, %v512
        %vm526 = vcmp.lt.s32.totalorder %v510, %v512
        %vm527 = vcmp.lt.s32.totalorder %v505, %v514
        %vm528 = vcmp.lt.s32.totalorder %v506, %v514
        %vm529 = vcmp.lt.s32.totalorder %v507, %v514
        %vm530 = vcmp.lt.s32.totalorder %v508, %v514
        %vm531 = vcmp.lt.s32.totalorder %v509, %v514
        %vm532 = vcmp.lt.s32.totalorder %v510, %v514
        %vm533 = vmand %vm515, %vm521
        %vm534 = vmand %vm516, %vm522
        %vm535 = vmand %vm517, %vm523
        %vm536 = vmand %vm518, %vm524
        %vm537 = vmand %vm519, %vm525
        %vm538 = vmand %vm520, %vm526
        %vm539 = vmand %vm515, %vm527
        %vm540 = vmand %vm516, %vm528
        %vm541 = vmand %vm517, %vm529
        %vm542 = vmand %vm518, %vm530
        %vm543 = vmand %vm519, %vm531
        %vm544 = vmand %vm520, %vm532
        %v545 = vsel %vm533, 1, 0
        %v546 = vsel %vm534, 1, 0
        %v547 = vsel %vm535, 1, 0
        %v548 = vsel %vm536, 1, 0
        %v549 = vsel %vm537, 1, 0
        %v550 = vsel %vm538, 1, 0
        %v551 = vsel %vm539, 1, 0
        %v552 = vsel %vm540, 1, 0
        %v553 = vsel %vm541, 1, 0
        %v554 = vsel %vm542, 1, 0
        %v555 = vsel %vm543, 1, 0
        %v556 = vsel %vm544, 1, 0
        %v557 = vcvt.s32.f32 %v545
        %v558 = vcvt.s32.f32 %v546
        %v559 = vcvt.s32.f32 %v547
        %v560 = vcvt.s32.f32 %v548
        %v561 = vcvt.s32.f32 %v549
        %v562 = vcvt.s32.f32 %v550
        %v563 = vcvt.s32.f32 %v551
        %v564 = vcvt.s32.f32 %v552
        %v565 = vcvt.s32.f32 %v553
        %v566 = vcvt.s32.f32 %v554
        %v567 = vcvt.s32.f32 %v555
        %v568 = vcvt.s32.f32 %v556
        %v569 = vrot.slane %v483, 7
        %v570 = vrot.slane %v484, 7
        %v571 = vrot.slane %v485, 7
        %v572 = vrot.slane %v486, 7
        %v573 = vrot.slane %v487, 7
        %v574 = vrot.slane %v488, 7
        %v575 = vrot.slane %v489, 7
        %v576 = vrot.slane %v490, 7
        %v577 = vrot.slane %v491, 7
        %v578 = vrot.slane %v492, 7
        %v579 = vrot.slane %v493, 7
        %v580 = vrot.slane %v494, 7
        %vm581 = vcmp.lt.s32.totalorder %v498, 1
        %v582 = vsel %vm581, %v579, %v580
        %v583 = vsel %vm581, %v578, %v579
        %v584 = vsel %vm581, %v577, %v578
        %v585 = vsel %vm581, %v576, %v577
        %v586 = vsel %vm581, %v575, %v576
        %v587 = vsel %vm581, %v574, %v575
        %v588 = vsel %vm581, %v573, %v574
        %v589 = vsel %vm581, %v572, %v573
        %v590 = vsel %vm581, %v571, %v572
        %v591 = vsel %vm581, %v570, %v571
        %v592 = vsel %vm581, %v569, %v570
        %v593 = vsel %vm581, %v580, %v569
        %v594 = vrot.slane %v483, 1
        %v595 = vrot.slane %v484, 1
        %v596 = vrot.slane %v485, 1
        %v597 = vrot.slane %v486, 1
        %v598 = vrot.slane %v487, 1
        %v599 = vrot.slane %v488, 1
        %v600 = vrot.slane %v489, 1
        %v601 = vrot.slane %v490, 1
        %v602 = vrot.slane %v491, 1
        %v603 = vrot.slane %v492, 1
        %v604 = vrot.slane %v493, 1
        %v605 = vrot.slane %v494, 1
        %vm606 = vcmp.lt.s32.totalorder %v498, 7
        %v607 = vsel %vm606, %v604, %v605
        %v608 = vsel %vm606, %v603, %v604
        %v609 = vsel %vm606, %v602, %v603
        %v610 = vsel %vm606, %v601, %v602
        %v611 = vsel %vm606, %v600, %v601
        %v612 = vsel %vm606, %v599, %v600
        %v613 = vsel %vm606, %v598, %v599
        %v614 = vsel %vm606, %v597, %v598
        %v615 = vsel %vm606, %v596, %v597
        %v616 = vsel %vm606, %v595, %v596
        %v617 = vsel %vm606, %v594, %v595
        %v618 = vsel %vm606, %v605, %v594
        %631 = vrot.lane.b32.xlu0 %v483, 32
        %v632 = vpop.permute.xlu0 %631
        %633 = vrot.lane.b32.xlu0 %v484, 32
        %v634 = vpop.permute.xlu0 %633
        %635 = vrot.lane.b32.xlu0 %v485, 32
        %v636 = vpop.permute.xlu0 %635
        %637 = vrot.lane.b32.xlu0 %v486, 32
        %v638 = vpop.permute.xlu0 %637
        %639 = vrot.lane.b32.xlu0 %v487, 32
        %v640 = vpop.permute.xlu0 %639
        %641 = vrot.lane.b32.xlu0 %v488, 32
        %v642 = vpop.permute.xlu0 %641
        %643 = vrot.lane.b32.xlu0 %v489, 32
        %v644 = vpop.permute.xlu0 %643
        %645 = vrot.lane.b32.xlu0 %v490, 32
        %v646 = vpop.permute.xlu0 %645
        %647 = vrot.lane.b32.xlu0 %v491, 32
        %v648 = vpop.permute.xlu0 %647
        %649 = vrot.lane.b32.xlu0 %v492, 32
        %v650 = vpop.permute.xlu0 %649
        %651 = vrot.lane.b32.xlu0 %v493, 32
        %v652 = vpop.permute.xlu0 %651
        %653 = vrot.lane.b32.xlu0 %v494, 32
        %v654 = vpop.permute.xlu0 %653
        %679 = vrot.lane.b32.xlu0 %v617, 64
        %v680 = vpop.permute.xlu0 %679
        %681 = vrot.lane.b32.xlu0 %v616, 64
        %v682 = vpop.permute.xlu0 %681
        %683 = vrot.lane.b32.xlu0 %v615, 64
        %v684 = vpop.permute.xlu0 %683
        %685 = vrot.lane.b32.xlu0 %v614, 64
        %v686 = vpop.permute.xlu0 %685
        %687 = vrot.lane.b32.xlu0 %v613, 64
        %v688 = vpop.permute.xlu0 %687
        %689 = vrot.lane.b32.xlu0 %v612, 64
        %v690 = vpop.permute.xlu0 %689
        %691 = vrot.lane.b32.xlu0 %v611, 64
        %v692 = vpop.permute.xlu0 %691
        %693 = vrot.lane.b32.xlu0 %v610, 64
        %v694 = vpop.permute.xlu0 %693
        %695 = vrot.lane.b32.xlu0 %v609, 64
        %v696 = vpop.permute.xlu0 %695
        %697 = vrot.lane.b32.xlu0 %v608, 64
        %v698 = vpop.permute.xlu0 %697
        %699 = vrot.lane.b32.xlu0 %v607, 64
        %v700 = vpop.permute.xlu0 %699
        %701 = vrot.lane.b32.xlu0 %v618, 64
        %v702 = vpop.permute.xlu0 %701
        %vm715 = vcmask 261120
        %v716 = vsel %vm715, %v593, %v632
        %v717 = vsel %vm715, %v592, %v634
        %v718 = vsel %vm715, %v591, %v636
        %v719 = vsel %vm715, %v590, %v638
        %v720 = vsel %vm715, %v589, %v640
        %v721 = vsel %vm715, %v588, %v642
        %v722 = vsel %vm715, %v587, %v644
        %v723 = vsel %vm715, %v586, %v646
        %v724 = vsel %vm715, %v585, %v648
        %v725 = vsel %vm715, %v584, %v650
        %v726 = vsel %vm715, %v583, %v652
        %v727 = vsel %vm715, %v582, %v654
        %vm728 = vcmask 523264
        %v729 = vsel %vm728, %v716, %v680
        %v730 = vsel %vm728, %v717, %v682
        %v731 = vsel %vm728, %v718, %v684
        %v732 = vsel %vm728, %v719, %v686
        %v733 = vsel %vm728, %v720, %v688
        %v734 = vsel %vm728, %v721, %v690
        %v735 = vsel %vm728, %v722, %v692
        %v736 = vsel %vm728, %v723, %v694
        %v737 = vsel %vm728, %v724, %v696
        %v738 = vsel %vm728, %v725, %v698
        %v739 = vsel %vm728, %v726, %v700
        %v740 = vsel %vm728, %v727, %v702
        %v741 = vpack.c.bf16 %v730, %v729
        %v742 = vpack.c.bf16 %v732, %v731
        %v743 = vpack.c.bf16 %v734, %v733
        %v744 = vpack.c.bf16 %v736, %v735
        %v745 = vpack.c.bf16 %v738, %v737
        %v746 = vpack.c.bf16 %v740, %v739
        %v747 = vld [vmem:[%s4] sm:$0xf]
        %v748 = vld [vmem:[%s4 + $0x4] sm:$0xf]
        %v749 = vld [vmem:[%s4 + $0x8] sm:$0xf]
        %v750 = vld [vmem:[%s4 + $0xc] sm:$0xf]
        %v751 = vld [vmem:[%s4 + $0x10] sm:$0xf]
        %v752 = vld [vmem:[%s4 + $0x14] sm:$0xf]
        %v753 = vld [vmem:[%s4 + $0x18] sm:$0xf]
        %v754 = vld [vmem:[%s4 + $0x1c] sm:$0xf]
        %v755 = vld [vmem:[%s4 + $0x20] sm:$0xf]
        %v756 = vld [vmem:[%s4 + $0x24] sm:$0xf]
        %v757 = vld [vmem:[%s4 + $0x28] sm:$0xf]
        %v758 = vld [vmem:[%s4 + $0x2c] sm:$0xf]
        %v759 = vld [vmem:[%s5] sm:$0x1]
        %v761 = vlaneseq
        %v762 = vshrl.u32 %v761, 7
        %v763 = vsub.s32 0, %v762
        %v764 = vrot.slane %v759, %v763
        %v778 = vunpack.c.l.b16 %v747
        %v779 = vunpack.c.l.b16 %v748
        %v780 = vunpack.c.l.b16 %v749
        %v781 = vunpack.c.l.b16 %v750
        %v782 = vunpack.c.l.b16 %v751
        %v783 = vunpack.c.l.b16 %v752
        %v784 = vunpack.c.l.b16 %v753
        %v785 = vunpack.c.l.b16 %v754
        %v786 = vunpack.c.l.b16 %v755
        %v787 = vunpack.c.l.b16 %v756
        %v788 = vunpack.c.l.b16 %v757
        %v789 = vunpack.c.l.b16 %v758
        %v790 = vpack.c.b16 %v779, %v778
        %v791 = vpack.c.b16 %v781, %v780
        %v792 = vpack.c.b16 %v783, %v782
        %v793 = vpack.c.b16 %v785, %v784
        %v794 = vpack.c.b16 %v787, %v786
        %v795 = vpack.c.b16 %v789, %v788
        %vm802 = vcmask 785408
        %v804 = vsel %vm802, %v741, 0
        %v807 = vsel %vm802, %v742, 0
        %v810 = vsel %vm802, %v743, 0
        %v813 = vsel %vm802, %v744, 0
        %v816 = vsel %vm802, %v745, 0
        %v819 = vsel %vm802, %v746, 0
        %821 = vmatprep.subr.bf16.mxu0 0
        %822 = vmatpush1.bf16.msra.mxu0 %v790
        %823 = vmatprep.subr.bf16.mxu0 0
        %824 = vmatpush1.bf16.msra.mxu0 %v791
        %825 = vmatprep.subr.bf16.mxu0 0
        %826 = vmatpush1.bf16.msra.mxu0 %v792
        %827 = vmatprep.subr.bf16.mxu0 0
        %828 = vmatpush1.bf16.msra.mxu0 %v793
        %829 = vmatprep.subr.bf16.mxu0 0
        %830 = vmatpush1.bf16.msra.mxu0 %v794
        %831 = vmatprep.subr.bf16.mxu0 0
        %832 = vmatpush1.bf16.msra.mxu0 %v795
        %833 = vmatprep.subr.bf16.mxu0 0
        %834 = vmatpush1.bf16.msra.mxu0 0
        %835 = vmatprep.subr.bf16.mxu0 0
        %836 = vmatpush1.bf16.msra.mxu0 0
        %837 = vmatprep.subr.bf16.mxu0 0
        %838 = vmatpush1.bf16.msra.mxu0 0
        %839 = vmatprep.subr.bf16.mxu0 0
        %840 = vmatpush1.bf16.msra.mxu0 0
        %841 = vmatprep.subr.bf16.mxu0 0
        %842 = vmatpush1.bf16.msra.mxu0 0
        %843 = vmatprep.subr.bf16.mxu0 0
        %844 = vmatpush1.bf16.msra.mxu0 0
        %845 = vmatprep.subr.bf16.mxu0 0
        %846 = vmatpush1.bf16.msra.mxu0 0
        %847 = vmatprep.subr.bf16.mxu0 0
        %848 = vmatpush1.bf16.msra.mxu0 0
        %849 = vmatprep.subr.bf16.mxu0 0
        %850 = vmatpush1.bf16.msra.mxu0 0
        %851 = vmatprep.subr.bf16.mxu0 0
        %852 = vmatpush1.bf16.msra.mxu0 0
        %853 = vmatprep.mubr.bf16.mxu0 0
        %854 = vmatmul.mubr.bf16.gmra.mrb[0].mxu0 %v804
        %v855 = vpop.f32.mrb[0].mxu0
        %v856 = vadd.f32 %v764, %v855
        %v857 = vpop.f32.mrb[0].mxu0
        %v858 = vpop.f32.mrb[0].mxu0
        %v859 = vadd.f32 %v764, %v858
        %v860 = vpop.f32.mrb[0].mxu0
        %861 = vmatprep.mubr.bf16.mxu0 0
        %862 = vmatmul.mubr.bf16.gmra.mrb[0].mxu0 %v807
        %v863 = vpop.f32.mrb[0].mxu0
        %v864 = vadd.f32 %v764, %v863
        %v865 = vpop.f32.mrb[0].mxu0
        %v866 = vpop.f32.mrb[0].mxu0
        %v867 = vadd.f32 %v764, %v866
        %v868 = vpop.f32.mrb[0].mxu0
        %869 = vmatprep.mubr.bf16.mxu0 0
        %870 = vmatmul.mubr.bf16.gmra.mrb[0].mxu0 %v810
        %v871 = vpop.f32.mrb[0].mxu0
        %v872 = vadd.f32 %v764, %v871
        %v873 = vpop.f32.mrb[0].mxu0
        %v874 = vpop.f32.mrb[0].mxu0
        %v875 = vadd.f32 %v764, %v874
        %v876 = vpop.f32.mrb[0].mxu0
        %877 = vmatprep.mubr.bf16.mxu0 0
        %878 = vmatmul.mubr.bf16.gmra.mrb[0].mxu0 %v813
        %v879 = vpop.f32.mrb[0].mxu0
        %v880 = vadd.f32 %v764, %v879
        %v881 = vpop.f32.mrb[0].mxu0
        %v882 = vpop.f32.mrb[0].mxu0
        %v883 = vadd.f32 %v764, %v882
        %v884 = vpop.f32.mrb[0].mxu0
        %885 = vmatprep.mubr.bf16.mxu0 0
        %886 = vmatmul.mubr.bf16.gmra.mrb[0].mxu0 %v816
        %v887 = vpop.f32.mrb[0].mxu0
        %v888 = vadd.f32 %v764, %v887
        %v889 = vpop.f32.mrb[0].mxu0
        %v890 = vpop.f32.mrb[0].mxu0
        %v891 = vadd.f32 %v764, %v890
        %v892 = vpop.f32.mrb[0].mxu0
        %893 = vmatprep.mubr.bf16.mxu0 0
        %894 = vmatmul.mubr.bf16.gmra.mrb[0].mxu0 %v819
        %v895 = vpop.f32.mrb[0].mxu0
        %v896 = vadd.f32 %v764, %v895
        %v897 = vpop.f32.mrb[0].mxu0
        %v898 = vpop.f32.mrb[0].mxu0
        %v899 = vadd.f32 %v764, %v898
        %v900 = vpop.f32.mrb[0].mxu0
        %901 = vdwg.mxu0
        %v902 = vmul.f32 %v856, %v557
        %v903 = vmul.f32 %v859, %v558
        %v904 = vmul.f32 %v864, %v559
        %v905 = vmul.f32 %v867, %v560
        %v906 = vmul.f32 %v872, %v561
        %v907 = vmul.f32 %v875, %v562
        %v908 = vmul.f32 %v880, %v563
        %v909 = vmul.f32 %v883, %v564
        %v910 = vmul.f32 %v888, %v565
        %v911 = vmul.f32 %v891, %v566
        %v912 = vmul.f32 %v896, %v567
        %v913 = vmul.f32 %v899, %v568
        %v914 = vmax.f32 %v902, 0.0
        %v915 = vmax.f32 %v903, 0.0
        %v916 = vmax.f32 %v904, 0.0
        %v917 = vmax.f32 %v905, 0.0
        %v918 = vmax.f32 %v906, 0.0
        %v919 = vmax.f32 %v907, 0.0
        %v920 = vmax.f32 %v908, 0.0
        %v921 = vmax.f32 %v909, 0.0
        %v922 = vmax.f32 %v910, 0.0
        %v923 = vmax.f32 %v911, 0.0
        %v924 = vmax.f32 %v912, 0.0
        %v925 = vmax.f32 %v913, 0.0
        %v926 = vrot.slane %v914, 7
        %v927 = vrot.slane %v915, 7
        %v928 = vrot.slane %v916, 7
        %v929 = vrot.slane %v917, 7
        %v930 = vrot.slane %v918, 7
        %v931 = vrot.slane %v919, 7
        %v932 = vrot.slane %v920, 7
        %v933 = vrot.slane %v921, 7
        %v934 = vrot.slane %v922, 7
        %v935 = vrot.slane %v923, 7
        %v936 = vrot.slane %v924, 7
        %v937 = vrot.slane %v925, 7
        %v938 = vsel %vm581, %v936, %v937
        %v939 = vsel %vm581, %v935, %v936
        %v940 = vsel %vm581, %v934, %v935
        %v941 = vsel %vm581, %v933, %v934
        %v942 = vsel %vm581, %v932, %v933
        %v943 = vsel %vm581, %v931, %v932
        %v944 = vsel %vm581, %v930, %v931
        %v945 = vsel %vm581, %v929, %v930
        %v946 = vsel %vm581, %v928, %v929
        %v947 = vsel %vm581, %v927, %v928
        %v948 = vsel %vm581, %v926, %v927
        %v949 = vsel %vm581, %v937, %v926
        %v950 = vrot.slane %v914, 1
        %v951 = vrot.slane %v915, 1
        %v952 = vrot.slane %v916, 1
        %v953 = vrot.slane %v917, 1
        %v954 = vrot.slane %v918, 1
        %v955 = vrot.slane %v919, 1
        %v956 = vrot.slane %v920, 1
        %v957 = vrot.slane %v921, 1
        %v958 = vrot.slane %v922, 1
        %v959 = vrot.slane %v923, 1
        %v960 = vrot.slane %v924, 1
        %v961 = vrot.slane %v925, 1
        %v962 = vsel %vm606, %v960, %v961
        %v963 = vsel %vm606, %v959, %v960
        %v964 = vsel %vm606, %v958, %v959
        %v965 = vsel %vm606, %v957, %v958
        %v966 = vsel %vm606, %v956, %v957
        %v967 = vsel %vm606, %v955, %v956
        %v968 = vsel %vm606, %v954, %v955
        %v969 = vsel %vm606, %v953, %v954
        %v970 = vsel %vm606, %v952, %v953
        %v971 = vsel %vm606, %v951, %v952
        %v972 = vsel %vm606, %v950, %v951
        %v973 = vsel %vm606, %v961, %v950
        %986 = vrot.lane.b32.xlu0 %v914, 32
        %v987 = vpop.permute.xlu0 %986
        %988 = vrot.lane.b32.xlu0 %v915, 32
        %v989 = vpop.permute.xlu0 %988
        %990 = vrot.lane.b32.xlu0 %v916, 32
        %v991 = vpop.permute.xlu0 %990
        %992 = vrot.lane.b32.xlu0 %v917, 32
        %v993 = vpop.permute.xlu0 %992
        %994 = vrot.lane.b32.xlu0 %v918, 32
        %v995 = vpop.permute.xlu0 %994
        %996 = vrot.lane.b32.xlu0 %v919, 32
        %v997 = vpop.permute.xlu0 %996
        %998 = vrot.lane.b32.xlu0 %v920, 32
        %v999 = vpop.permute.xlu0 %998
        %1000 = vrot.lane.b32.xlu0 %v921, 32
        %v1001 = vpop.permute.xlu0 %1000
        %1002 = vrot.lane.b32.xlu0 %v922, 32
        %v1003 = vpop.permute.xlu0 %1002
        %1004 = vrot.lane.b32.xlu0 %v923, 32
        %v1005 = vpop.permute.xlu0 %1004
        %1006 = vrot.lane.b32.xlu0 %v924, 32
        %v1007 = vpop.permute.xlu0 %1006
        %1008 = vrot.lane.b32.xlu0 %v925, 32
        %v1009 = vpop.permute.xlu0 %1008
        %1034 = vrot.lane.b32.xlu0 %v972, 64
        %v1035 = vpop.permute.xlu0 %1034
        %1036 = vrot.lane.b32.xlu0 %v971, 64
        %v1037 = vpop.permute.xlu0 %1036
        %1038 = vrot.lane.b32.xlu0 %v970, 64
        %v1039 = vpop.permute.xlu0 %1038
        %1040 = vrot.lane.b32.xlu0 %v969, 64
        %v1041 = vpop.permute.xlu0 %1040
        %1042 = vrot.lane.b32.xlu0 %v968, 64
        %v1043 = vpop.permute.xlu0 %1042
        %1044 = vrot.lane.b32.xlu0 %v967, 64
        %v1045 = vpop.permute.xlu0 %1044
        %1046 = vrot.lane.b32.xlu0 %v966, 64
        %v1047 = vpop.permute.xlu0 %1046
        %1048 = vrot.lane.b32.xlu0 %v965, 64
        %v1049 = vpop.permute.xlu0 %1048
        %1050 = vrot.lane.b32.xlu0 %v964, 64
        %v1051 = vpop.permute.xlu0 %1050
        %1052 = vrot.lane.b32.xlu0 %v963, 64
        %v1053 = vpop.permute.xlu0 %1052
        %1054 = vrot.lane.b32.xlu0 %v962, 64
        %v1055 = vpop.permute.xlu0 %1054
        %1056 = vrot.lane.b32.xlu0 %v973, 64
        %v1057 = vpop.permute.xlu0 %1056
        %v1070 = vsel %vm715, %v949, %v987
        %v1071 = vsel %vm715, %v948, %v989
        %v1072 = vsel %vm715, %v947, %v991
        %v1073 = vsel %vm715, %v946, %v993
        %v1074 = vsel %vm715, %v945, %v995
        %v1075 = vsel %vm715, %v944, %v997
        %v1076 = vsel %vm715, %v943, %v999
        %v1077 = vsel %vm715, %v942, %v1001
        %v1078 = vsel %vm715, %v941, %v1003
        %v1079 = vsel %vm715, %v940, %v1005
        %v1080 = vsel %vm715, %v939, %v1007
        %v1081 = vsel %vm715, %v938, %v1009
        %v1082 = vsel %vm728, %v1070, %v1035
        %v1083 = vsel %vm728, %v1071, %v1037
        %v1084 = vsel %vm728, %v1072, %v1039
        %v1085 = vsel %vm728, %v1073, %v1041
        %v1086 = vsel %vm728, %v1074, %v1043
        %v1087 = vsel %vm728, %v1075, %v1045
        %v1088 = vsel %vm728, %v1076, %v1047
        %v1089 = vsel %vm728, %v1077, %v1049
        %v1090 = vsel %vm728, %v1078, %v1051
        %v1091 = vsel %vm728, %v1079, %v1053
        %v1092 = vsel %vm728, %v1080, %v1055
        %v1093 = vsel %vm728, %v1081, %v1057
        %v1094 = vpack.c.bf16 %v1083, %v1082
        %v1095 = vpack.c.bf16 %v1085, %v1084
        %v1096 = vpack.c.bf16 %v1087, %v1086
        %v1097 = vpack.c.bf16 %v1089, %v1088
        %v1098 = vpack.c.bf16 %v1091, %v1090
        %v1099 = vpack.c.bf16 %v1093, %v1092
        %v1100 = vld [vmem:[%s6] sm:$0xf]
        %v1101 = vld [vmem:[%s6 + $0x4] sm:$0xf]
        %v1102 = vld [vmem:[%s6 + $0x8] sm:$0xf]
        %v1103 = vld [vmem:[%s6 + $0xc] sm:$0xf]
        %v1104 = vld [vmem:[%s6 + $0x10] sm:$0xf]
        %v1105 = vld [vmem:[%s6 + $0x14] sm:$0xf]
        %v1106 = vld [vmem:[%s6 + $0x18] sm:$0xf]
        %v1107 = vld [vmem:[%s6 + $0x1c] sm:$0xf]
        %v1108 = vld [vmem:[%s6 + $0x20] sm:$0xf]
        %v1109 = vld [vmem:[%s6 + $0x24] sm:$0xf]
        %v1110 = vld [vmem:[%s6 + $0x28] sm:$0xf]
        %v1111 = vld [vmem:[%s6 + $0x2c] sm:$0xf]
        %v1112 = vld [vmem:[%s7] sm:$0x1]
        %v1114 = vlaneseq
        %v1115 = vshrl.u32 %v1114, 7
        %v1116 = vsub.s32 0, %v1115
        %v1117 = vrot.slane %v1112, %v1116
        %v1131 = vunpack.c.l.b16 %v1100
        %v1132 = vunpack.c.l.b16 %v1101
        %v1133 = vunpack.c.l.b16 %v1102
        %v1134 = vunpack.c.l.b16 %v1103
        %v1135 = vunpack.c.l.b16 %v1104
        %v1136 = vunpack.c.l.b16 %v1105
        %v1137 = vunpack.c.l.b16 %v1106
        %v1138 = vunpack.c.l.b16 %v1107
        %v1139 = vunpack.c.l.b16 %v1108
        %v1140 = vunpack.c.l.b16 %v1109
        %v1141 = vunpack.c.l.b16 %v1110
        %v1142 = vunpack.c.l.b16 %v1111
        %v1143 = vpack.c.b16 %v1132, %v1131
        %v1144 = vpack.c.b16 %v1134, %v1133
        %v1145 = vpack.c.b16 %v1136, %v1135
        %v1146 = vpack.c.b16 %v1138, %v1137
        %v1147 = vpack.c.b16 %v1140, %v1139
        %v1148 = vpack.c.b16 %v1142, %v1141
        %v1156 = vsel %vm802, %v1094, 0
        %v1159 = vsel %vm802, %v1095, 0
        %v1162 = vsel %vm802, %v1096, 0
        %v1165 = vsel %vm802, %v1097, 0
        %v1168 = vsel %vm802, %v1098, 0
        %v1171 = vsel %vm802, %v1099, 0
        %1173 = vmatprep.subr.bf16.mxu0 0
        %1174 = vmatpush1.bf16.msra.mxu0 %v1143
        %1175 = vmatprep.subr.bf16.mxu0 0
        %1176 = vmatpush1.bf16.msra.mxu0 %v1144
        %1177 = vmatprep.subr.bf16.mxu0 0
        %1178 = vmatpush1.bf16.msra.mxu0 %v1145
        %1179 = vmatprep.subr.bf16.mxu0 0
        %1180 = vmatpush1.bf16.msra.mxu0 %v1146
        %1181 = vmatprep.subr.bf16.mxu0 0
        %1182 = vmatpush1.bf16.msra.mxu0 %v1147
        %1183 = vmatprep.subr.bf16.mxu0 0
        %1184 = vmatpush1.bf16.msra.mxu0 %v1148
        %1185 = vmatprep.subr.bf16.mxu0 0
        %1186 = vmatpush1.bf16.msra.mxu0 0
        %1187 = vmatprep.subr.bf16.mxu0 0
        %1188 = vmatpush1.bf16.msra.mxu0 0
        %1189 = vmatprep.subr.bf16.mxu0 0
        %1190 = vmatpush1.bf16.msra.mxu0 0
        %1191 = vmatprep.subr.bf16.mxu0 0
        %1192 = vmatpush1.bf16.msra.mxu0 0
        %1193 = vmatprep.subr.bf16.mxu0 0
        %1194 = vmatpush1.bf16.msra.mxu0 0
        %1195 = vmatprep.subr.bf16.mxu0 0
        %1196 = vmatpush1.bf16.msra.mxu0 0
        %1197 = vmatprep.subr.bf16.mxu0 0
        %1198 = vmatpush1.bf16.msra.mxu0 0
        %1199 = vmatprep.subr.bf16.mxu0 0
        %1200 = vmatpush1.bf16.msra.mxu0 0
        %1201 = vmatprep.subr.bf16.mxu0 0
        %1202 = vmatpush1.bf16.msra.mxu0 0
        %1203 = vmatprep.subr.bf16.mxu0 0
        %1204 = vmatpush1.bf16.msra.mxu0 0
        %1205 = vmatprep.mubr.bf16.mxu0 0
        %1206 = vmatmul.mubr.bf16.gmra.mrb[0].mxu0 %v1156
        %v1207 = vpop.f32.mrb[0].mxu0
        %v1208 = vadd.f32 %v1117, %v1207
        %v1209 = vpop.f32.mrb[0].mxu0
        %v1210 = vpop.f32.mrb[0].mxu0
        %v1211 = vadd.f32 %v1117, %v1210
        %v1212 = vpop.f32.mrb[0].mxu0
        %1213 = vmatprep.mubr.bf16.mxu0 0
        %1214 = vmatmul.mubr.bf16.gmra.mrb[0].mxu0 %v1159
        %v1215 = vpop.f32.mrb[0].mxu0
        %v1216 = vadd.f32 %v1117, %v1215
        %v1217 = vpop.f32.mrb[0].mxu0
        %v1218 = vpop.f32.mrb[0].mxu0
        %v1219 = vadd.f32 %v1117, %v1218
        %v1220 = vpop.f32.mrb[0].mxu0
        %1221 = vmatprep.mubr.bf16.mxu0 0
        %1222 = vmatmul.mubr.bf16.gmra.mrb[0].mxu0 %v1162
        %v1223 = vpop.f32.mrb[0].mxu0
        %v1224 = vadd.f32 %v1117, %v1223
        %v1225 = vpop.f32.mrb[0].mxu0
        %v1226 = vpop.f32.mrb[0].mxu0
        %v1227 = vadd.f32 %v1117, %v1226
        %v1228 = vpop.f32.mrb[0].mxu0
        %1229 = vmatprep.mubr.bf16.mxu0 0
        %1230 = vmatmul.mubr.bf16.gmra.mrb[0].mxu0 %v1165
        %v1231 = vpop.f32.mrb[0].mxu0
        %v1232 = vadd.f32 %v1117, %v1231
        %v1233 = vpop.f32.mrb[0].mxu0
        %v1234 = vpop.f32.mrb[0].mxu0
        %v1235 = vadd.f32 %v1117, %v1234
        %v1236 = vpop.f32.mrb[0].mxu0
        %1237 = vmatprep.mubr.bf16.mxu0 0
        %1238 = vmatmul.mubr.bf16.gmra.mrb[0].mxu0 %v1168
        %v1239 = vpop.f32.mrb[0].mxu0
        %v1240 = vadd.f32 %v1117, %v1239
        %v1241 = vpop.f32.mrb[0].mxu0
        %v1242 = vpop.f32.mrb[0].mxu0
        %v1243 = vadd.f32 %v1117, %v1242
        %v1244 = vpop.f32.mrb[0].mxu0
        %1245 = vmatprep.mubr.bf16.mxu0 0
        %1246 = vmatmul.mubr.bf16.gmra.mrb[0].mxu0 %v1171
        %v1247 = vpop.f32.mrb[0].mxu0
        %v1248 = vadd.f32 %v1117, %v1247
        %v1249 = vpop.f32.mrb[0].mxu0
        %v1250 = vpop.f32.mrb[0].mxu0
        %v1251 = vadd.f32 %v1117, %v1250
        %v1252 = vpop.f32.mrb[0].mxu0
        %1253 = vdwg.mxu0
        %v1254 = vmul.f32 %v1208, %v557
        %v1255 = vmul.f32 %v1211, %v558
        %v1256 = vmul.f32 %v1216, %v559
        %v1257 = vmul.f32 %v1219, %v560
        %v1258 = vmul.f32 %v1224, %v561
        %v1259 = vmul.f32 %v1227, %v562
        %v1260 = vmul.f32 %v1232, %v563
        %v1261 = vmul.f32 %v1235, %v564
        %v1262 = vmul.f32 %v1240, %v565
        %v1263 = vmul.f32 %v1243, %v566
        %v1264 = vmul.f32 %v1248, %v567
        %v1265 = vmul.f32 %v1251, %v568
        %v1266 = vmax.f32 %v1254, 0.0
        %v1267 = vmax.f32 %v1255, 0.0
        %v1268 = vmax.f32 %v1256, 0.0
        %v1269 = vmax.f32 %v1257, 0.0
        %v1270 = vmax.f32 %v1258, 0.0
        %v1271 = vmax.f32 %v1259, 0.0
        %v1272 = vmax.f32 %v1260, 0.0
        %v1273 = vmax.f32 %v1261, 0.0
        %v1274 = vmax.f32 %v1262, 0.0
        %v1275 = vmax.f32 %v1263, 0.0
        %v1276 = vmax.f32 %v1264, 0.0
        %v1277 = vmax.f32 %v1265, 0.0
        %v1278 = vrot.slane %v1266, 7
        %v1279 = vrot.slane %v1267, 7
        %v1280 = vrot.slane %v1268, 7
        %v1281 = vrot.slane %v1269, 7
        %v1282 = vrot.slane %v1270, 7
        %v1283 = vrot.slane %v1271, 7
        %v1284 = vrot.slane %v1272, 7
        %v1285 = vrot.slane %v1273, 7
        %v1286 = vrot.slane %v1274, 7
        %v1287 = vrot.slane %v1275, 7
        %v1288 = vrot.slane %v1276, 7
        %v1289 = vrot.slane %v1277, 7
        %v1290 = vsel %vm581, %v1288, %v1289
        %v1291 = vsel %vm581, %v1287, %v1288
        %v1292 = vsel %vm581, %v1286, %v1287
        %v1293 = vsel %vm581, %v1285, %v1286
        %v1294 = vsel %vm581, %v1284, %v1285
        %v1295 = vsel %vm581, %v1283, %v1284
        %v1296 = vsel %vm581, %v1282, %v1283
        %v1297 = vsel %vm581, %v1281, %v1282
        %v1298 = vsel %vm581, %v1280, %v1281
        %v1299 = vsel %vm581, %v1279, %v1280
        %v1300 = vsel %vm581, %v1278, %v1279
        %v1301 = vsel %vm581, %v1289, %v1278
        %v1302 = vrot.slane %v1266, 1
        %v1303 = vrot.slane %v1267, 1
        %v1304 = vrot.slane %v1268, 1
        %v1305 = vrot.slane %v1269, 1
        %v1306 = vrot.slane %v1270, 1
        %v1307 = vrot.slane %v1271, 1
        %v1308 = vrot.slane %v1272, 1
        %v1309 = vrot.slane %v1273, 1
        %v1310 = vrot.slane %v1274, 1
        %v1311 = vrot.slane %v1275, 1
        %v1312 = vrot.slane %v1276, 1
        %v1313 = vrot.slane %v1277, 1
        %v1314 = vsel %vm606, %v1312, %v1313
        %v1315 = vsel %vm606, %v1311, %v1312
        %v1316 = vsel %vm606, %v1310, %v1311
        %v1317 = vsel %vm606, %v1309, %v1310
        %v1318 = vsel %vm606, %v1308, %v1309
        %v1319 = vsel %vm606, %v1307, %v1308
        %v1320 = vsel %vm606, %v1306, %v1307
        %v1321 = vsel %vm606, %v1305, %v1306
        %v1322 = vsel %vm606, %v1304, %v1305
        %v1323 = vsel %vm606, %v1303, %v1304
        %v1324 = vsel %vm606, %v1302, %v1303
        %v1325 = vsel %vm606, %v1313, %v1302
        %1338 = vrot.lane.b32.xlu0 %v1266, 32
        %v1339 = vpop.permute.xlu0 %1338
        %1340 = vrot.lane.b32.xlu0 %v1267, 32
        %v1341 = vpop.permute.xlu0 %1340
        %1342 = vrot.lane.b32.xlu0 %v1268, 32
        %v1343 = vpop.permute.xlu0 %1342
        %1344 = vrot.lane.b32.xlu0 %v1269, 32
        %v1345 = vpop.permute.xlu0 %1344
        %1346 = vrot.lane.b32.xlu0 %v1270, 32
        %v1347 = vpop.permute.xlu0 %1346
        %1348 = vrot.lane.b32.xlu0 %v1271, 32
        %v1349 = vpop.permute.xlu0 %1348
        %1350 = vrot.lane.b32.xlu0 %v1272, 32
        %v1351 = vpop.permute.xlu0 %1350
        %1352 = vrot.lane.b32.xlu0 %v1273, 32
        %v1353 = vpop.permute.xlu0 %1352
        %1354 = vrot.lane.b32.xlu0 %v1274, 32
        %v1355 = vpop.permute.xlu0 %1354
        %1356 = vrot.lane.b32.xlu0 %v1275, 32
        %v1357 = vpop.permute.xlu0 %1356
        %1358 = vrot.lane.b32.xlu0 %v1276, 32
        %v1359 = vpop.permute.xlu0 %1358
        %1360 = vrot.lane.b32.xlu0 %v1277, 32
        %v1361 = vpop.permute.xlu0 %1360
        %1386 = vrot.lane.b32.xlu0 %v1324, 64
        %v1387 = vpop.permute.xlu0 %1386
        %1388 = vrot.lane.b32.xlu0 %v1323, 64
        %v1389 = vpop.permute.xlu0 %1388
        %1390 = vrot.lane.b32.xlu0 %v1322, 64
        %v1391 = vpop.permute.xlu0 %1390
        %1392 = vrot.lane.b32.xlu0 %v1321, 64
        %v1393 = vpop.permute.xlu0 %1392
        %1394 = vrot.lane.b32.xlu0 %v1320, 64
        %v1395 = vpop.permute.xlu0 %1394
        %1396 = vrot.lane.b32.xlu0 %v1319, 64
        %v1397 = vpop.permute.xlu0 %1396
        %1398 = vrot.lane.b32.xlu0 %v1318, 64
        %v1399 = vpop.permute.xlu0 %1398
        %1400 = vrot.lane.b32.xlu0 %v1317, 64
        %v1401 = vpop.permute.xlu0 %1400
        %1402 = vrot.lane.b32.xlu0 %v1316, 64
        %v1403 = vpop.permute.xlu0 %1402
        %1404 = vrot.lane.b32.xlu0 %v1315, 64
        %v1405 = vpop.permute.xlu0 %1404
        %1406 = vrot.lane.b32.xlu0 %v1314, 64
        %v1407 = vpop.permute.xlu0 %1406
        %1408 = vrot.lane.b32.xlu0 %v1325, 64
        %v1409 = vpop.permute.xlu0 %1408
        %v1422 = vsel %vm715, %v1301, %v1339
        %v1423 = vsel %vm715, %v1300, %v1341
        %v1424 = vsel %vm715, %v1299, %v1343
        %v1425 = vsel %vm715, %v1298, %v1345
        %v1426 = vsel %vm715, %v1297, %v1347
        %v1427 = vsel %vm715, %v1296, %v1349
        %v1428 = vsel %vm715, %v1295, %v1351
        %v1429 = vsel %vm715, %v1294, %v1353
        %v1430 = vsel %vm715, %v1293, %v1355
        %v1431 = vsel %vm715, %v1292, %v1357
        %v1432 = vsel %vm715, %v1291, %v1359
        %v1433 = vsel %vm715, %v1290, %v1361
        %v1434 = vsel %vm728, %v1422, %v1387
        %v1435 = vsel %vm728, %v1423, %v1389
        %v1436 = vsel %vm728, %v1424, %v1391
        %v1437 = vsel %vm728, %v1425, %v1393
        %v1438 = vsel %vm728, %v1426, %v1395
        %v1439 = vsel %vm728, %v1427, %v1397
        %v1440 = vsel %vm728, %v1428, %v1399
        %v1441 = vsel %vm728, %v1429, %v1401
        %v1442 = vsel %vm728, %v1430, %v1403
        %v1443 = vsel %vm728, %v1431, %v1405
        %v1444 = vsel %vm728, %v1432, %v1407
        %v1445 = vsel %vm728, %v1433, %v1409
        %v1446 = vpack.c.bf16 %v1435, %v1434
        %v1447 = vpack.c.bf16 %v1437, %v1436
        %v1448 = vpack.c.bf16 %v1439, %v1438
        %v1449 = vpack.c.bf16 %v1441, %v1440
        %v1450 = vpack.c.bf16 %v1443, %v1442
        %v1451 = vpack.c.bf16 %v1445, %v1444
        %v1452 = vld [vmem:[%s8] sm:$0xf]
        %v1453 = vld [vmem:[%s8 + $0x4] sm:$0xf]
        %v1454 = vld [vmem:[%s8 + $0x8] sm:$0xf]
        %v1455 = vld [vmem:[%s8 + $0xc] sm:$0xf]
        %v1456 = vld [vmem:[%s8 + $0x10] sm:$0xf]
        %v1457 = vld [vmem:[%s8 + $0x14] sm:$0xf]
        %v1458 = vld [vmem:[%s8 + $0x18] sm:$0xf]
        %v1459 = vld [vmem:[%s8 + $0x1c] sm:$0xf]
        %v1460 = vld [vmem:[%s8 + $0x20] sm:$0xf]
        %v1461 = vld [vmem:[%s8 + $0x24] sm:$0xf]
        %v1462 = vld [vmem:[%s8 + $0x28] sm:$0xf]
        %v1463 = vld [vmem:[%s8 + $0x2c] sm:$0xf]
        %v1464 = vld [vmem:[%s9] sm:$0x1]
        %v1466 = vlaneseq
        %v1467 = vshrl.u32 %v1466, 7
        %v1468 = vsub.s32 0, %v1467
        %v1469 = vrot.slane %v1464, %v1468
        %v1483 = vunpack.c.l.b16 %v1452
        %v1484 = vunpack.c.l.b16 %v1453
        %v1485 = vunpack.c.l.b16 %v1454
        %v1486 = vunpack.c.l.b16 %v1455
        %v1487 = vunpack.c.l.b16 %v1456
        %v1488 = vunpack.c.l.b16 %v1457
        %v1489 = vunpack.c.l.b16 %v1458
        %v1490 = vunpack.c.l.b16 %v1459
        %v1491 = vunpack.c.l.b16 %v1460
        %v1492 = vunpack.c.l.b16 %v1461
        %v1493 = vunpack.c.l.b16 %v1462
        %v1494 = vunpack.c.l.b16 %v1463
        %v1495 = vpack.c.b16 %v1484, %v1483
        %v1496 = vpack.c.b16 %v1486, %v1485
        %v1497 = vpack.c.b16 %v1488, %v1487
        %v1498 = vpack.c.b16 %v1490, %v1489
        %v1499 = vpack.c.b16 %v1492, %v1491
        %v1500 = vpack.c.b16 %v1494, %v1493
        %v1508 = vsel %vm802, %v1446, 0
        %v1511 = vsel %vm802, %v1447, 0
        %v1514 = vsel %vm802, %v1448, 0
        %v1517 = vsel %vm802, %v1449, 0
        %v1520 = vsel %vm802, %v1450, 0
        %v1523 = vsel %vm802, %v1451, 0
        %1525 = vmatprep.subr.bf16.mxu0 0
        %1526 = vmatpush1.bf16.msra.mxu0 %v1495
        %1527 = vmatprep.subr.bf16.mxu0 0
        %1528 = vmatpush1.bf16.msra.mxu0 %v1496
        %1529 = vmatprep.subr.bf16.mxu0 0
        %1530 = vmatpush1.bf16.msra.mxu0 %v1497
        %1531 = vmatprep.subr.bf16.mxu0 0
        %1532 = vmatpush1.bf16.msra.mxu0 %v1498
        %1533 = vmatprep.subr.bf16.mxu0 0
        %1534 = vmatpush1.bf16.msra.mxu0 %v1499
        %1535 = vmatprep.subr.bf16.mxu0 0
        %1536 = vmatpush1.bf16.msra.mxu0 %v1500
        %1537 = vmatprep.subr.bf16.mxu0 0
        %1538 = vmatpush1.bf16.msra.mxu0 0
        %1539 = vmatprep.subr.bf16.mxu0 0
        %1540 = vmatpush1.bf16.msra.mxu0 0
        %1541 = vmatprep.subr.bf16.mxu0 0
        %1542 = vmatpush1.bf16.msra.mxu0 0
        %1543 = vmatprep.subr.bf16.mxu0 0
        %1544 = vmatpush1.bf16.msra.mxu0 0
        %1545 = vmatprep.subr.bf16.mxu0 0
        %1546 = vmatpush1.bf16.msra.mxu0 0
        %1547 = vmatprep.subr.bf16.mxu0 0
        %1548 = vmatpush1.bf16.msra.mxu0 0
        %1549 = vmatprep.subr.bf16.mxu0 0
        %1550 = vmatpush1.bf16.msra.mxu0 0
        %1551 = vmatprep.subr.bf16.mxu0 0
        %1552 = vmatpush1.bf16.msra.mxu0 0
        %1553 = vmatprep.subr.bf16.mxu0 0
        %1554 = vmatpush1.bf16.msra.mxu0 0
        %1555 = vmatprep.subr.bf16.mxu0 0
        %1556 = vmatpush1.bf16.msra.mxu0 0
        %1557 = vmatprep.mubr.bf16.mxu0 0
        %1558 = vmatmul.mubr.bf16.gmra.mrb[0].mxu0 %v1508
        %v1559 = vpop.f32.mrb[0].mxu0
        %v1560 = vpop.f32.mrb[0].mxu0
        %v1561 = vpop.f32.mrb[0].mxu0
        %v1562 = vpop.f32.mrb[0].mxu0
        %1563 = vmatprep.mubr.bf16.mxu0 0
        %1564 = vmatmul.mubr.bf16.gmra.mrb[0].mxu0 %v1511
        %v1565 = vpop.f32.mrb[0].mxu0
        %v1566 = vadd.f32 %v1469, %v1565
        %v1567 = vpop.f32.mrb[0].mxu0
        %v1568 = vpop.f32.mrb[0].mxu0
        %v1569 = vadd.f32 %v1469, %v1568
        %v1570 = vpop.f32.mrb[0].mxu0
        %1571 = vmatprep.mubr.bf16.mxu0 0
        %1572 = vmatmul.mubr.bf16.gmra.mrb[0].mxu0 %v1514
        %v1573 = vpop.f32.mrb[0].mxu0
        %v1574 = vpop.f32.mrb[0].mxu0
        %v1575 = vpop.f32.mrb[0].mxu0
        %v1576 = vpop.f32.mrb[0].mxu0
        %1577 = vmatprep.mubr.bf16.mxu0 0
        %1578 = vmatmul.mubr.bf16.gmra.mrb[0].mxu0 %v1517
        %v1579 = vpop.f32.mrb[0].mxu0
        %v1580 = vpop.f32.mrb[0].mxu0
        %v1581 = vpop.f32.mrb[0].mxu0
        %v1582 = vpop.f32.mrb[0].mxu0
        %1583 = vmatprep.mubr.bf16.mxu0 0
        %1584 = vmatmul.mubr.bf16.gmra.mrb[0].mxu0 %v1520
        %v1585 = vpop.f32.mrb[0].mxu0
        %v1586 = vadd.f32 %v1469, %v1585
        %v1587 = vpop.f32.mrb[0].mxu0
        %v1588 = vpop.f32.mrb[0].mxu0
        %v1589 = vadd.f32 %v1469, %v1588
        %v1590 = vpop.f32.mrb[0].mxu0
        %1591 = vmatprep.mubr.bf16.mxu0 0
        %1592 = vmatmul.mubr.bf16.gmra.mrb[0].mxu0 %v1523
        %v1593 = vpop.f32.mrb[0].mxu0
        %v1594 = vpop.f32.mrb[0].mxu0
        %v1595 = vpop.f32.mrb[0].mxu0
        %v1596 = vpop.f32.mrb[0].mxu0
        %1597 = vdwg.mxu0
        %v1598 = vmul.f32 %v1566, %v559
        %v1599 = vmul.f32 %v1569, %v560
        %v1600 = vmul.f32 %v1586, %v565
        %v1601 = vmul.f32 %v1589, %v566
        %1602 = vst [vmem:[%s421] sm:$0xff] %v1598
        %1603 = vst [vmem:[%s421 + $0x8] sm:$0xff] %v1599
        %1604 = vst [vmem:[%s421 + $0x10] sm:$0xff] %v1600
        %1605 = vst [vmem:[%s421 + $0x18] sm:$0xff] %v1601
        %s1606 = sand.u32 %s242, 1
        %s1607 = scalar_lea.sflag [#allocation6], %s1606
        %s1608 = sand.u32 %s242, 1
        %s1609 = smul.addr %s1608, 32
        %s1610 = scalar_lea.vmem [#allocation5], %s1609
        // Predicated region
        $region98: #{tpu_custom_call.1} parent=92 // pred_check
          %p1611 = pneg %p252
        $region99: #{tpu_custom_call.1} parent=92 // pred_check_branch
          %1613 = sbr.rel (%p1611) target = $region101
        $region100: #{tpu_custom_call.1} parent=92 // pred_region
          #allocation8 [shape = 'u32[6]{0}', space=smem, size = 0x18, scoped, tag = 'DMA stride descriptor']
          %s1614 = smul.u32 2, %s30
          %s1616 = ssub.s32 512, 512
          %1617 = vsyncadd %s1607, %s1616
          %s1618 = smul.addr %s1614, 128
          %s1619 = scalar_lea.hbm %s10, %s1618
          %s1621 = sshll.u32 1, 14
          %s1622 = sxor.u32 4294967295, %s1621
          %s1625 = sshll.u32 7, 18
          %s1626 = sxor.u32 4294967295, %s1625
          %s1627 = sand.u32 0, %s1626
          %s1629 = sor.u32 %s1627, 0
          %s1631 = sshll.u32 3, 24
          %s1632 = sxor.u32 4294967295, %s1631
          %s1633 = sand.u32 %s1629, %s1632
          %s1635 = sor.u32 %s1633, 0
          %s1636 = sshll.u32 %s1610, 4
          %s1637 = int_to_ptr.vmem [resolvable:$true] %s1636
          %1643 = sst [smem:[#allocation8]] 256
          %s1644 = scalar_lea.smem [#allocation8], 1
          %1645 = sst [smem:[%s1644]] 768
          %s1646 = scalar_lea.smem [#allocation8], 2
          %1647 = sst [smem:[%s1646]] 2
          %s1648 = scalar_lea.smem [#allocation8], 3
          %1649 = sst [smem:[%s1648]] 128
          %s1650 = scalar_lea.smem [#allocation8], 4
          %1651 = sst [smem:[%s1650]] 128
          %s1652 = scalar_lea.smem [#allocation8], 5
          %1653 = sst [smem:[%s1652]] 8
          %1655 = dma.general %s1637, 512, %s1619, %s1607, [#allocation7], [#allocation8], %s1635, 0
        $region101: #{tpu_custom_call.1} parent=92 // pred_fallthru
          _
      $region93: #{tpu_custom_call.1} parent=5 // pred_fallthru
        _
      %p1656 = scmp.le.s32.totalorder 2, %s25
      // Predicated region
      $region102: #{tpu_custom_call.1} parent=5 // pred_check
        %p1657 = pneg %p1656
      $region103: #{tpu_custom_call.1} parent=5 // pred_check_branch
        %1659 = sbr.rel (%p1657) target = $region105
      $region104: #{tpu_custom_call.1} parent=5 // pred_region
        %s1660 = ssub.s32 %s25, 2
        // Predicated region
        $region106: #{tpu_custom_call.1} parent=104 // pred_check
          %p1661 = pneg %p258
        $region107: #{tpu_custom_call.1} parent=104 // pred_check_branch
          %1663 = sbr.rel (%p1661) target = $region109
        $region108: #{tpu_custom_call.1} parent=104 // pred_region
          %s1664 = sand.u32 %s243, 1
          %s1665 = scalar_lea.sflag [#allocation6], %s1664
          %s1666 = sand.u32 %s243, 1
          %s1667 = smul.addr %s1666, 32
          %s1668 = scalar_lea.vmem [#allocation5], %s1667
          %1669 = dma.done %s1665, 512
        $region109: #{tpu_custom_call.1} parent=104 // pred_fallthru
          _
      $region105: #{tpu_custom_call.1} parent=5 // pred_fallthru
        _
    $region6: #{tpu_custom_call.1} parent=1 // loop_footer
      %s29 = sadd.s32 1, %s25
    $region7: #{tpu_custom_call.1} parent=1 // loop_footer_branch
      %24 = sbr.rel target = $region3
    $region8: #{tpu_custom_call.1} parent=1 // loop_exit
      _
    %1670 = vsyncpa [#allocation6], 1
    %s1671 = scalar_lea.sflag [#allocation6], 1
    %1672 = vsyncpa %s1671, 1

</llo_original>
